<compile_context>
chip_gen: v7x
topology: tpu7x:2x2x1
jax: 0.10.0
libtpu: 0.0.40
codegen_flags: <defaults>
</compile_context>

<pallas_src>
import jax
import jax.numpy as jnp
import numpy as np
from jax.experimental import pallas as pl
from jax.experimental.pallas import tpu as pltpu

EPS = 1e-5
KSIZE = 5
PAD = 2


# ---------------------------------------------------------------------------
# Pass 1: conv (depth-tap-accumulating matmul) + BN partial statistics
# ---------------------------------------------------------------------------
def conv_stats_kernel(x_ref, w_ref, conv_ref, sum_ref, ssq_ref):
    """Grid = (N, D, KSIZE).  One step adds the contribution of depth-tap kd.

    x_ref    : [1, 1, H*W, 25*Cin]  bf16  (kh,kw)-unfolded input slice at d+kd
    w_ref    : [1, 25*Cin, Cout]    bf16  weights of depth-tap kd
    conv_ref : [1, 1, H*W, Cout]    f32   conv accumulator (revisited output)
    sum_ref  : [1, 1, 1, Cout]      f32   per-(n,d) sum    (written at last kd)
    ssq_ref  : [1, 1, 1, Cout]      f32   per-(n,d) sumsq  (written at last kd)
    """
    kd = pl.program_id(2)

    @pl.when(kd == 0)
    def _init():
        conv_ref[...] = jnp.zeros_like(conv_ref)

    # bf16 x bf16 -> f32 accumulate on the MXU (default precision).
    conv_ref[0, 0] += jnp.dot(x_ref[0, 0], w_ref[0],
                              preferred_element_type=jnp.float32)

    @pl.when(kd == pl.num_programs(2) - 1)
    def _finalize():
        c = conv_ref[0, 0]                                   # [H*W, Cout] f32
        sum_ref[0, 0] = jnp.sum(c, axis=0, keepdims=True)
        ssq_ref[0, 0] = jnp.sum(c * c, axis=0, keepdims=True)


# ---------------------------------------------------------------------------
# Pass 2: y = max(conv * scale + shift, 0)   (BN + ReLU, stats pre-folded)
# ---------------------------------------------------------------------------
def bn_relu_kernel(conv_ref, scale_ref, shift_ref, out_ref):
    out_ref[0] = jnp.maximum(conv_ref[0] * scale_ref[...] + shift_ref[...], 0.0)


# ---------------------------------------------------------------------------
# Wrappers
# ---------------------------------------------------------------------------
def _unfold_hw(x_ndhwc):
    """[N,D,H,W,C] -> padded + (kh,kw)-unfolded [N, D+4, H*W, 25*C] in bf16."""
    n, d, h, w, c = x_ndhwc.shape
    xp = jnp.pad(x_ndhwc, ((0, 0), (PAD, PAD), (PAD, PAD), (PAD, PAD), (0, 0)))
    xp = xp.astype(jnp.bfloat16)
    slabs = [xp[:, :, kh:kh + h, kw:kw + w, :]
             for kh in range(KSIZE) for kw in range(KSIZE)]
    xcol = jnp.stack(slabs, axis=4)                  # [N, D+4, H, W, 25, C]
    return xcol.reshape(n, d + 2 * PAD, h * w, KSIZE * KSIZE * c)


def conv_bn_relu_layer(x_ndhwc, w_torch, gamma, beta):
    """One Conv3d(+bias, folded) + BatchNorm3d(train) + ReLU block, NDHWC."""
    n, d, h, w, cin = x_ndhwc.shape
    cout = w_torch.shape[0]
    hw = h * w
    kp = KSIZE * KSIZE * cin                         # contraction per depth tap
    m = n * d * hw

    xcol = _unfold_hw(x_ndhwc)                       # [N, D+4, H*W, 25*Cin] bf16
    # [Cout, Cin, kd, kh, kw] -> [kd, (kh, kw, Cin), Cout], bf16 for the MXU.
    w2 = jnp.transpose(w_torch, (2, 3, 4, 1, 0)).reshape(KSIZE, kp, cout)
    w2 = w2.astype(jnp.bfloat16)

    conv, psum, pssq = pl.pallas_call(
        conv_stats_kernel,
        grid=(n, d, KSIZE),
        in_specs=[
            # Overlapping depth window: block index along D+4 axis is d + kd.
            pl.BlockSpec((1, 1, hw, kp), lambda ni, di, kd: (ni, di + kd, 0, 0)),
            pl.BlockSpec((1, kp, cout), lambda ni, di, kd: (kd, 0, 0)),
        ],
        out_specs=[
            pl.BlockSpec((1, 1, hw, cout), lambda ni, di, kd: (ni, di, 0, 0)),
            pl.BlockSpec((1, 1, 1, cout), lambda ni, di, kd: (ni, di, 0, 0)),
            pl.BlockSpec((1, 1, 1, cout), lambda ni, di, kd: (ni, di, 0, 0)),
        ],
        out_shape=[
            jax.ShapeDtypeStruct((n, d, hw, cout), jnp.float32),
            jax.ShapeDtypeStruct((n, d, 1, cout), jnp.float32),
            jax.ShapeDtypeStruct((n, d, 1, cout), jnp.float32),
        ],
        compiler_params=pltpu.CompilerParams(
            dimension_semantics=("parallel", "parallel", "arbitrary")),
    )(xcol, w2)

    # Tiny cross-tile reduction + BN folding (conv bias cancels exactly).
    mean = jnp.sum(psum, axis=(0, 1, 2)) / m
    var = jnp.maximum(jnp.sum(pssq, axis=(0, 1, 2)) / m - mean * mean, 0.0)
    scale = gamma * jax.lax.rsqrt(var + EPS)
    shift = beta - mean * scale

    # Pass 2: fused scale/shift + ReLU.  Present a lane-dense (128) last dim
    # whenever possible so loads/stores are unmasked full-lane ops.
    if cout <= 128 and 128 % cout == 0 and (hw * cout) % 128 == 0:
        cols = (hw * cout) // 128
        conv_v = conv.reshape(n * d, cols, 128)
        scale_v = jnp.tile(scale, 128 // cout).reshape(1, 128)
        shift_v = jnp.tile(shift, 128 // cout).reshape(1, 128)
    else:
        cols = hw
        conv_v = conv.reshape(n * d, hw, cout)
        scale_v = scale.reshape(1, cout)
        shift_v = shift.reshape(1, cout)
    lanes = conv_v.shape[-1]

    act = pl.pallas_call(
        bn_relu_kernel,
        grid=(n * d,),
        in_specs=[
            pl.BlockSpec((1, cols, lanes), lambda i: (i, 0, 0)),
            pl.BlockSpec((1, lanes), lambda i: (0, 0)),
            pl.BlockSpec((1, lanes), lambda i: (0, 0)),
        ],
        out_specs=pl.BlockSpec((1, cols, lanes), lambda i: (i, 0, 0)),
        out_shape=jax.ShapeDtypeStruct((n * d, cols, lanes), jnp.float32),
        compiler_params=pltpu.CompilerParams(dimension_semantics=("parallel",)),
    )(conv_v, scale_v, shift_v)

    return act.reshape(n, d, h, w, cout)


def cnn_3d_forward(x_ncdhw, params):
    """Full CNN_3D forward; input/output in PyTorch NCDHW layout.

    Conv biases (params["b1"], params["b2"]) are accepted but unused: each
    conv is immediately followed by a training-mode BatchNorm, whose mean
    subtraction cancels the bias exactly.
    """
    x = jnp.transpose(x_ncdhw, (0, 2, 3, 4, 1))      # NCDHW -> NDHWC
    x = conv_bn_relu_layer(x, params["w1"], params["g1"], params["beta1"])
    x = conv_bn_relu_layer(x, params["w2"], params["g2"], params["beta2"])
    return jnp.transpose(x, (0, 4, 1, 2, 3))         # NDHWC -> NCDHW


# ---------------------------------------------------------------------------
# Pure-JAX reference (correctness check).  It mirrors the kernel's bf16 MXU
# quantization (bf16 operands, f32 accumulation) and *does* apply the conv
# bias, demonstrating that the Pallas path's bias folding is exact.
# ---------------------------------------------------------------------------
def _ref_layer(x_ndhwc, w_torch, bias, gamma, beta):
    k = jnp.transpose(w_torch, (2, 3, 4, 1, 0)).astype(jnp.bfloat16)  # DHWIO
    conv = jax.lax.conv_general_dilated(
        x_ndhwc.astype(jnp.bfloat16), k,
        window_strides=(1, 1, 1), padding=((PAD, PAD),) * 3,
        dimension_numbers=("NDHWC", "DHWIO", "NDHWC"),
        preferred_element_type=jnp.float32,
    ) + bias
    mean = conv.mean(axis=(0, 1, 2, 3), keepdims=True)
    var = ((conv - mean) ** 2).mean(axis=(0, 1, 2, 3), keepdims=True)
    y = (conv - mean) * jax.lax.rsqrt(var + EPS) * gamma + beta
    return jnp.maximum(y, 0.0)


def _ref_forward(x_ncdhw, p):
    x = jnp.transpose(x_ncdhw, (0, 2, 3, 4, 1))
    x = _ref_layer(x, p["w1"], p["b1"], p["g1"], p["beta1"])
    x = _ref_layer(x, p["w2"], p["b2"], p["g2"], p["beta2"])
    return jnp.transpose(x, (0, 4, 1, 2, 3))


if __name__ == "__main__":
    key = jax.random.PRNGKey(0)
    (k_x, k_w1, k_b1, k_g1, k_bt1,
     k_w2, k_b2, k_g2, k_bt2) = jax.random.split(key, 9)

    N, CIN, D, H, W = 2, 1, 8, 8, 8
    COUT = 32

    x = jax.random.normal(k_x, (N, CIN, D, H, W), dtype=jnp.float32)

    fan1 = CIN * KSIZE ** 3
    fan2 = COUT * KSIZE ** 3
    params = {
        "w1": jax.random.normal(k_w1, (COUT, CIN, KSIZE, KSIZE, KSIZE), jnp.float32)
        * (1.0 / np.sqrt(fan1)),
        "b1": jax.random.normal(k_b1, (COUT,), jnp.float32) * 0.01,
        "g1": 1.0 + 0.1 * jax.random.normal(k_g1, (COUT,), jnp.float32),
        "beta1": 0.1 * jax.random.normal(k_bt1, (COUT,), jnp.float32),
        "w2": jax.random.normal(k_w2, (COUT, COUT, KSIZE, KSIZE, KSIZE), jnp.float32)
        * (1.0 / np.sqrt(fan2)),
        "b2": jax.random.normal(k_b2, (COUT,), jnp.float32) * 0.01,
        "g2": 1.0 + 0.1 * jax.random.normal(k_g2, (COUT,), jnp.float32),
        "beta2": 0.1 * jax.random.normal(k_bt2, (COUT,), jnp.float32),
    }

    out = jax.block_until_ready(jax.jit(cnn_3d_forward)(x, params))
    assert out.shape == (N, COUT, D, H, W), out.shape

    ref = jax.block_until_ready(jax.jit(_ref_forward)(x, params))
    np.testing.assert_allclose(np.asarray(out), np.asarray(ref),
                               rtol=2e-3, atol=2e-3)
    print("KERNEL_OK")
</pallas_src>

<mosaic_0001>
module attributes {stable_mosaic.version = 11 : i64} {
  func.func @conv_stats_kernel(%arg0: i32, %arg1: i32, %arg2: i32, %arg3: memref<1x1x64x25xbf16, #tpu.memory_space<vmem>>, %arg4: memref<1x25x32xbf16, #tpu.memory_space<vmem>>, %arg5: memref<1x1x64x32xf32, #tpu.memory_space<vmem>>, %arg6: memref<1x1x1x32xf32, #tpu.memory_space<vmem>>, %arg7: memref<1x1x1x32xf32, #tpu.memory_space<vmem>>) attributes {dimension_semantics = [#tpu.dimension_semantics<parallel>, #tpu.dimension_semantics<parallel>, #tpu.dimension_semantics<arbitrary>], iteration_bounds = array<i64: 2, 8, 5>, scalar_prefetch = 0 : i64, scratch_operands = 0 : i64, tpu.core_type = #tpu.core_type<tc>, window_params = [{transform_indices = @transform_0, window_bounds = array<i64: 1, 1, 64, 25>}, {transform_indices = @transform_1, window_bounds = array<i64: 1, 25, 32>}, {transform_indices = @transform_2, window_bounds = array<i64: 1, 1, 64, 32>}, {transform_indices = @transform_3, window_bounds = array<i64: 1, 1, 1, 32>}, {transform_indices = @transform_4, window_bounds = array<i64: 1, 1, 1, 32>}]} {
    %c0_i32 = arith.constant 0 : i32
    %0 = arith.cmpi eq, %arg2, %c0_i32 : i32
    %1 = arith.extui %0 : i1 to i32
    %c0_i32_0 = arith.constant 0 : i32
    %2 = arith.cmpi ne, %1, %c0_i32_0 : i32
    scf.if %2 {
      %cst_16 = arith.constant 0.000000e+00 : f32
      %17 = vector.broadcast %cst_16 : f32 to vector<1x1x64x32xf32>
      %c0_17 = arith.constant 0 : index
      %c0_18 = arith.constant 0 : index
      %c0_19 = arith.constant 0 : index
      %c0_20 = arith.constant 0 : index
      %18 = vector.load %arg5[%c0_17, %c0_18, %c0_19, %c0_20] : memref<1x1x64x32xf32, #tpu.memory_space<vmem>>, vector<1x1x64x32xf32>
      tpu.vector_store %arg5[%c0_17, %c0_18, %c0_19, %c0_20], %17 {strides = array<i32>} : memref<1x1x64x32xf32, #tpu.memory_space<vmem>>, vector<1x1x64x32xf32>,
    } else {
    }
    %c0 = arith.constant 0 : index
    %c0_1 = arith.constant 0 : index
    %c0_2 = arith.constant 0 : index
    %c0_3 = arith.constant 0 : index
    %3 = vector.load %arg5[%c0, %c0_1, %c0_2, %c0_3] : memref<1x1x64x32xf32, #tpu.memory_space<vmem>>, vector<1x1x64x32xf32>
    %4 = vector.shape_cast %3 : vector<1x1x64x32xf32> to vector<64x32xf32>
    %c0_4 = arith.constant 0 : index
    %c0_5 = arith.constant 0 : index
    %c0_6 = arith.constant 0 : index
    %c0_7 = arith.constant 0 : index
    %5 = vector.load %arg3[%c0_4, %c0_5, %c0_6, %c0_7] : memref<1x1x64x25xbf16, #tpu.memory_space<vmem>>, vector<1x1x64x25xbf16>
    %6 = vector.shape_cast %5 : vector<1x1x64x25xbf16> to vector<64x25xbf16>
    %c0_8 = arith.constant 0 : index
    %c0_9 = arith.constant 0 : index
    %c0_10 = arith.constant 0 : index
    %7 = vector.load %arg4[%c0_8, %c0_9, %c0_10] : memref<1x25x32xbf16, #tpu.memory_space<vmem>>, vector<1x25x32xbf16>
    %8 = vector.shape_cast %7 : vector<1x25x32xbf16> to vector<25x32xbf16>
    %cst = arith.constant dense<0.000000e+00> : vector<64x32xf32>
    %9 = tpu.matmul %6, %8, %cst {dimension_numbers = #tpu.dot_dimension_numbers<[1], [0], [0], [1], [0, 0, 1, 1], [], []>} : vector<64x25xbf16>, vector<25x32xbf16>, vector<64x32xf32> -> vector<64x32xf32>
    %10 = arith.addf %4, %9 : vector<64x32xf32>
    %c0_11 = arith.constant 0 : index
    %c0_12 = arith.constant 0 : index
    %c0_13 = arith.constant 0 : index
    %c0_14 = arith.constant 0 : index
    %11 = vector.load %arg5[%c0_11, %c0_12, %c0_13, %c0_14] : memref<1x1x64x32xf32, #tpu.memory_space<vmem>>, vector<1x1x64x32xf32>
    %12 = vector.shape_cast %11 : vector<1x1x64x32xf32> to vector<64x32xf32>
    %13 = vector.shape_cast %10 : vector<64x32xf32> to vector<1x1x64x32xf32>
    tpu.vector_store %arg5[%c0_11, %c0_12, %c0_13, %c0_14], %13 {strides = array<i32>} : memref<1x1x64x32xf32, #tpu.memory_space<vmem>>, vector<1x1x64x32xf32>,
    %c4_i32 = arith.constant 4 : i32
    %14 = arith.cmpi eq, %arg2, %c4_i32 : i32
    %15 = arith.extui %14 : i1 to i32
    %c0_i32_15 = arith.constant 0 : i32
    %16 = arith.cmpi ne, %15, %c0_i32_15 : i32
    scf.if %16 {
      %c0_16 = arith.constant 0 : index
      %c0_17 = arith.constant 0 : index
      %c0_18 = arith.constant 0 : index
      %c0_19 = arith.constant 0 : index
      %17 = vector.load %arg5[%c0_16, %c0_17, %c0_18, %c0_19] : memref<1x1x64x32xf32, #tpu.memory_space<vmem>>, vector<1x1x64x32xf32>
      %18 = vector.shape_cast %17 : vector<1x1x64x32xf32> to vector<64x32xf32>
      %cst_20 = arith.constant dense<0.000000e+00> : vector<32xf32>
      %19 = vector.multi_reduction <add>, %18, %cst_20 [0] : vector<64x32xf32> to vector<32xf32>
      %20 = vector.shape_cast %19 : vector<32xf32> to vector<1x32xf32>
      %c0_21 = arith.constant 0 : index
      %c0_22 = arith.constant 0 : index
      %c0_23 = arith.constant 0 : index
      %c0_24 = arith.constant 0 : index
      %21 = vector.load %arg6[%c0_21, %c0_22, %c0_23, %c0_24] : memref<1x1x1x32xf32, #tpu.memory_space<vmem>>, vector<1x1x1x32xf32>
      %22 = vector.shape_cast %21 : vector<1x1x1x32xf32> to vector<1x32xf32>
      %23 = vector.shape_cast %20 : vector<1x32xf32> to vector<1x1x1x32xf32>
      tpu.vector_store %arg6[%c0_21, %c0_22, %c0_23, %c0_24], %23 {strides = array<i32>} : memref<1x1x1x32xf32, #tpu.memory_space<vmem>>, vector<1x1x1x32xf32>,
      %24 = arith.mulf %18, %18 : vector<64x32xf32>
      %cst_25 = arith.constant dense<0.000000e+00> : vector<32xf32>
      %25 = vector.multi_reduction <add>, %24, %cst_25 [0] : vector<64x32xf32> to vector<32xf32>
      %26 = vector.shape_cast %25 : vector<32xf32> to vector<1x32xf32>
      %c0_26 = arith.constant 0 : index
      %c0_27 = arith.constant 0 : index
      %c0_28 = arith.constant 0 : index
      %c0_29 = arith.constant 0 : index
      %27 = vector.load %arg7[%c0_26, %c0_27, %c0_28, %c0_29] : memref<1x1x1x32xf32, #tpu.memory_space<vmem>>, vector<1x1x1x32xf32>
      %28 = vector.shape_cast %27 : vector<1x1x1x32xf32> to vector<1x32xf32>
      %29 = vector.shape_cast %26 : vector<1x32xf32> to vector<1x1x1x32xf32>
      tpu.vector_store %arg7[%c0_26, %c0_27, %c0_28, %c0_29], %29 {strides = array<i32>} : memref<1x1x1x32xf32, #tpu.memory_space<vmem>>, vector<1x1x1x32xf32>,
    } else {
    }
    return
  }
  func.func @transform_0(%arg0: i32, %arg1: i32, %arg2: i32) -> (i32, i32, i32, i32) {
    %0 = arith.addi %arg1, %arg2 : i32
    %c0_i32 = arith.constant 0 : i32
    %c0_i32_0 = arith.constant 0 : i32
    %c0_i32_1 = arith.constant 0 : i32
    return %arg0, %0, %c0_i32, %c0_i32_0 : i32, i32, i32, i32
  }
  func.func @transform_1(%arg0: i32, %arg1: i32, %arg2: i32) -> (i32, i32, i32) {
    %c0_i32 = arith.constant 0 : i32
    %c0_i32_0 = arith.constant 0 : i32
    %c0_i32_1 = arith.constant 0 : i32
    return %arg2, %c0_i32, %c0_i32_0 : i32, i32, i32
  }
  func.func @transform_2(%arg0: i32, %arg1: i32, %arg2: i32) -> (i32, i32, i32, i32) {
    %c0_i32 = arith.constant 0 : i32
    %c0_i32_0 = arith.constant 0 : i32
    %c0_i32_1 = arith.constant 0 : i32
    return %arg0, %arg1, %c0_i32, %c0_i32_0 : i32, i32, i32, i32
  }
  func.func @transform_3(%arg0: i32, %arg1: i32, %arg2: i32) -> (i32, i32, i32, i32) {
    %c0_i32 = arith.constant 0 : i32
    %c0_i32_0 = arith.constant 0 : i32
    %c0_i32_1 = arith.constant 0 : i32
    return %arg0, %arg1, %c0_i32, %c0_i32_0 : i32, i32, i32, i32
  }
  func.func @transform_4(%arg0: i32, %arg1: i32, %arg2: i32) -> (i32, i32, i32, i32) {
    %c0_i32 = arith.constant 0 : i32
    %c0_i32_0 = arith.constant 0 : i32
    %c0_i32_1 = arith.constant 0 : i32
    return %arg0, %arg1, %c0_i32, %c0_i32_0 : i32, i32, i32, i32
  }
}

module attributes {stable_mosaic.version = 11 : i64} {
  func.func @bn_relu_kernel(%arg0: i32, %arg1: memref<1x16x128xf32, #tpu.memory_space<vmem>>, %arg2: memref<1x128xf32, #tpu.memory_space<vmem>>, %arg3: memref<1x128xf32, #tpu.memory_space<vmem>>, %arg4: memref<1x16x128xf32, #tpu.memory_space<vmem>>) attributes {dimension_semantics = [#tpu.dimension_semantics<parallel>], iteration_bounds = array<i64: 16>, scalar_prefetch = 0 : i64, scratch_operands = 0 : i64, tpu.core_type = #tpu.core_type<tc>, window_params = [{transform_indices = @transform_0, window_bounds = array<i64: 1, 16, 128>}, {pipeline_mode = #tpu.pipeline_mode<synchronous>, transform_indices = @transform_1, window_bounds = array<i64: 1, 128>}, {pipeline_mode = #tpu.pipeline_mode<synchronous>, transform_indices = @transform_2, window_bounds = array<i64: 1, 128>}, {transform_indices = @transform_3, window_bounds = array<i64: 1, 16, 128>}]} {
    %c0 = arith.constant 0 : index
    %c0_0 = arith.constant 0 : index
    %c0_1 = arith.constant 0 : index
    %0 = vector.load %arg1[%c0, %c0_0, %c0_1] : memref<1x16x128xf32, #tpu.memory_space<vmem>>, vector<1x16x128xf32>
    %1 = vector.shape_cast %0 : vector<1x16x128xf32> to vector<16x128xf32>
    %c0_2 = arith.constant 0 : index
    %c0_3 = arith.constant 0 : index
    %2 = vector.load %arg2[%c0_2, %c0_3] : memref<1x128xf32, #tpu.memory_space<vmem>>, vector<1x128xf32>
    %3 = vector.broadcast %2 : vector<1x128xf32> to vector<16x128xf32>
    %4 = arith.mulf %1, %3 : vector<16x128xf32>
    %c0_4 = arith.constant 0 : index
    %c0_5 = arith.constant 0 : index
    %5 = vector.load %arg3[%c0_4, %c0_5] : memref<1x128xf32, #tpu.memory_space<vmem>>, vector<1x128xf32>
    %6 = vector.broadcast %5 : vector<1x128xf32> to vector<16x128xf32>
    %7 = arith.addf %4, %6 : vector<16x128xf32>
    %cst = arith.constant 0.000000e+00 : f32
    %8 = vector.broadcast %cst : f32 to vector<16x128xf32>
    %9 = arith.maximumf %7, %8 : vector<16x128xf32>
    %c0_6 = arith.constant 0 : index
    %c0_7 = arith.constant 0 : index
    %c0_8 = arith.constant 0 : index
    %10 = vector.load %arg4[%c0_6, %c0_7, %c0_8] : memref<1x16x128xf32, #tpu.memory_space<vmem>>, vector<1x16x128xf32>
    %11 = vector.shape_cast %10 : vector<1x16x128xf32> to vector<16x128xf32>
    %12 = vector.shape_cast %9 : vector<16x128xf32> to vector<1x16x128xf32>
    tpu.vector_store %arg4[%c0_6, %c0_7, %c0_8], %12 {strides = array<i32>} : memref<1x16x128xf32, #tpu.memory_space<vmem>>, vector<1x16x128xf32>,
    return
  }
  func.func @transform_0(%arg0: i32) -> (i32, i32, i32) {
    %c0_i32 = arith.constant 0 : i32
    %c0_i32_0 = arith.constant 0 : i32
    %c0_i32_1 = arith.constant 0 : i32
    return %arg0, %c0_i32, %c0_i32_0 : i32, i32, i32
  }
  func.func @transform_1(%arg0: i32) -> (i32, i32) {
    %c0_i32 = arith.constant 0 : i32
    %c0_i32_0 = arith.constant 0 : i32
    %c0_i32_1 = arith.constant 0 : i32
    return %c0_i32, %c0_i32_0 : i32, i32
  }
  func.func @transform_2(%arg0: i32) -> (i32, i32) {
    %c0_i32 = arith.constant 0 : i32
    %c0_i32_0 = arith.constant 0 : i32
    %c0_i32_1 = arith.constant 0 : i32
    return %c0_i32, %c0_i32_0 : i32, i32
  }
  func.func @transform_3(%arg0: i32) -> (i32, i32, i32) {
    %c0_i32 = arith.constant 0 : i32
    %c0_i32_0 = arith.constant 0 : i32
    %c0_i32_1 = arith.constant 0 : i32
    return %arg0, %c0_i32, %c0_i32_0 : i32, i32, i32
  }
}

module attributes {stable_mosaic.version = 11 : i64} {
  func.func @conv_stats_kernel(%arg0: i32, %arg1: i32, %arg2: i32, %arg3: memref<1x1x64x800xbf16, #tpu.memory_space<vmem>>, %arg4: memref<1x800x32xbf16, #tpu.memory_space<vmem>>, %arg5: memref<1x1x64x32xf32, #tpu.memory_space<vmem>>, %arg6: memref<1x1x1x32xf32, #tpu.memory_space<vmem>>, %arg7: memref<1x1x1x32xf32, #tpu.memory_space<vmem>>) attributes {dimension_semantics = [#tpu.dimension_semantics<parallel>, #tpu.dimension_semantics<parallel>, #tpu.dimension_semantics<arbitrary>], iteration_bounds = array<i64: 2, 8, 5>, scalar_prefetch = 0 : i64, scratch_operands = 0 : i64, tpu.core_type = #tpu.core_type<tc>, window_params = [{transform_indices = @transform_0, window_bounds = array<i64: 1, 1, 64, 800>}, {transform_indices = @transform_1, window_bounds = array<i64: 1, 800, 32>}, {transform_indices = @transform_2, window_bounds = array<i64: 1, 1, 64, 32>}, {transform_indices = @transform_3, window_bounds = array<i64: 1, 1, 1, 32>}, {transform_indices = @transform_4, window_bounds = array<i64: 1, 1, 1, 32>}]} {
    %c0_i32 = arith.constant 0 : i32
    %0 = arith.cmpi eq, %arg2, %c0_i32 : i32
    %1 = arith.extui %0 : i1 to i32
    %c0_i32_0 = arith.constant 0 : i32
    %2 = arith.cmpi ne, %1, %c0_i32_0 : i32
    scf.if %2 {
      %cst_16 = arith.constant 0.000000e+00 : f32
      %17 = vector.broadcast %cst_16 : f32 to vector<1x1x64x32xf32>
      %c0_17 = arith.constant 0 : index
      %c0_18 = arith.constant 0 : index
      %c0_19 = arith.constant 0 : index
      %c0_20 = arith.constant 0 : index
      %18 = vector.load %arg5[%c0_17, %c0_18, %c0_19, %c0_20] : memref<1x1x64x32xf32, #tpu.memory_space<vmem>>, vector<1x1x64x32xf32>
      tpu.vector_store %arg5[%c0_17, %c0_18, %c0_19, %c0_20], %17 {strides = array<i32>} : memref<1x1x64x32xf32, #tpu.memory_space<vmem>>, vector<1x1x64x32xf32>,
    } else {
    }
    %c0 = arith.constant 0 : index
    %c0_1 = arith.constant 0 : index
    %c0_2 = arith.constant 0 : index
    %c0_3 = arith.constant 0 : index
    %3 = vector.load %arg5[%c0, %c0_1, %c0_2, %c0_3] : memref<1x1x64x32xf32, #tpu.memory_space<vmem>>, vector<1x1x64x32xf32>
    %4 = vector.shape_cast %3 : vector<1x1x64x32xf32> to vector<64x32xf32>
    %c0_4 = arith.constant 0 : index
    %c0_5 = arith.constant 0 : index
    %c0_6 = arith.constant 0 : index
    %c0_7 = arith.constant 0 : index
    %5 = vector.load %arg3[%c0_4, %c0_5, %c0_6, %c0_7] : memref<1x1x64x800xbf16, #tpu.memory_space<vmem>>, vector<1x1x64x800xbf16>
    %6 = vector.shape_cast %5 : vector<1x1x64x800xbf16> to vector<64x800xbf16>
    %c0_8 = arith.constant 0 : index
    %c0_9 = arith.constant 0 : index
    %c0_10 = arith.constant 0 : index
    %7 = vector.load %arg4[%c0_8, %c0_9, %c0_10] : memref<1x800x32xbf16, #tpu.memory_space<vmem>>, vector<1x800x32xbf16>
    %8 = vector.shape_cast %7 : vector<1x800x32xbf16> to vector<800x32xbf16>
    %cst = arith.constant dense<0.000000e+00> : vector<64x32xf32>
    %9 = tpu.matmul %6, %8, %cst {dimension_numbers = #tpu.dot_dimension_numbers<[1], [0], [0], [1], [0, 0, 1, 1], [], []>} : vector<64x800xbf16>, vector<800x32xbf16>, vector<64x32xf32> -> vector<64x32xf32>
    %10 = arith.addf %4, %9 : vector<64x32xf32>
    %c0_11 = arith.constant 0 : index
    %c0_12 = arith.constant 0 : index
    %c0_13 = arith.constant 0 : index
    %c0_14 = arith.constant 0 : index
    %11 = vector.load %arg5[%c0_11, %c0_12, %c0_13, %c0_14] : memref<1x1x64x32xf32, #tpu.memory_space<vmem>>, vector<1x1x64x32xf32>
    %12 = vector.shape_cast %11 : vector<1x1x64x32xf32> to vector<64x32xf32>
    %13 = vector.shape_cast %10 : vector<64x32xf32> to vector<1x1x64x32xf32>
    tpu.vector_store %arg5[%c0_11, %c0_12, %c0_13, %c0_14], %13 {strides = array<i32>} : memref<1x1x64x32xf32, #tpu.memory_space<vmem>>, vector<1x1x64x32xf32>,
    %c4_i32 = arith.constant 4 : i32
    %14 = arith.cmpi eq, %arg2, %c4_i32 : i32
    %15 = arith.extui %14 : i1 to i32
    %c0_i32_15 = arith.constant 0 : i32
    %16 = arith.cmpi ne, %15, %c0_i32_15 : i32
    scf.if %16 {
      %c0_16 = arith.constant 0 : index
      %c0_17 = arith.constant 0 : index
      %c0_18 = arith.constant 0 : index
      %c0_19 = arith.constant 0 : index
      %17 = vector.load %arg5[%c0_16, %c0_17, %c0_18, %c0_19] : memref<1x1x64x32xf32, #tpu.memory_space<vmem>>, vector<1x1x64x32xf32>
      %18 = vector.shape_cast %17 : vector<1x1x64x32xf32> to vector<64x32xf32>
      %cst_20 = arith.constant dense<0.000000e+00> : vector<32xf32>
      %19 = vector.multi_reduction <add>, %18, %cst_20 [0] : vector<64x32xf32> to vector<32xf32>
      %20 = vector.shape_cast %19 : vector<32xf32> to vector<1x32xf32>
      %c0_21 = arith.constant 0 : index
      %c0_22 = arith.constant 0 : index
      %c0_23 = arith.constant 0 : index
      %c0_24 = arith.constant 0 : index
      %21 = vector.load %arg6[%c0_21, %c0_22, %c0_23, %c0_24] : memref<1x1x1x32xf32, #tpu.memory_space<vmem>>, vector<1x1x1x32xf32>
      %22 = vector.shape_cast %21 : vector<1x1x1x32xf32> to vector<1x32xf32>
      %23 = vector.shape_cast %20 : vector<1x32xf32> to vector<1x1x1x32xf32>
      tpu.vector_store %arg6[%c0_21, %c0_22, %c0_23, %c0_24], %23 {strides = array<i32>} : memref<1x1x1x32xf32, #tpu.memory_space<vmem>>, vector<1x1x1x32xf32>,
      %24 = arith.mulf %18, %18 : vector<64x32xf32>
      %cst_25 = arith.constant dense<0.000000e+00> : vector<32xf32>
      %25 = vector.multi_reduction <add>, %24, %cst_25 [0] : vector<64x32xf32> to vector<32xf32>
      %26 = vector.shape_cast %25 : vector<32xf32> to vector<1x32xf32>
      %c0_26 = arith.constant 0 : index
      %c0_27 = arith.constant 0 : index
      %c0_28 = arith.constant 0 : index
      %c0_29 = arith.constant 0 : index
      %27 = vector.load %arg7[%c0_26, %c0_27, %c0_28, %c0_29] : memref<1x1x1x32xf32, #tpu.memory_space<vmem>>, vector<1x1x1x32xf32>
      %28 = vector.shape_cast %27 : vector<1x1x1x32xf32> to vector<1x32xf32>
      %29 = vector.shape_cast %26 : vector<1x32xf32> to vector<1x1x1x32xf32>
      tpu.vector_store %arg7[%c0_26, %c0_27, %c0_28, %c0_29], %29 {strides = array<i32>} : memref<1x1x1x32xf32, #tpu.memory_space<vmem>>, vector<1x1x1x32xf32>,
    } else {
    }
    return
  }
  func.func @transform_0(%arg0: i32, %arg1: i32, %arg2: i32) -> (i32, i32, i32, i32) {
    %0 = arith.addi %arg1, %arg2 : i32
    %c0_i32 = arith.constant 0 : i32
    %c0_i32_0 = arith.constant 0 : i32
    %c0_i32_1 = arith.constant 0 : i32
    return %arg0, %0, %c0_i32, %c0_i32_0 : i32, i32, i32, i32
  }
  func.func @transform_1(%arg0: i32, %arg1: i32, %arg2: i32) -> (i32, i32, i32) {
    %c0_i32 = arith.constant 0 : i32
    %c0_i32_0 = arith.constant 0 : i32
    %c0_i32_1 = arith.constant 0 : i32
    return %arg2, %c0_i32, %c0_i32_0 : i32, i32, i32
  }
  func.func @transform_2(%arg0: i32, %arg1: i32, %arg2: i32) -> (i32, i32, i32, i32) {
    %c0_i32 = arith.constant 0 : i32
    %c0_i32_0 = arith.constant 0 : i32
    %c0_i32_1 = arith.constant 0 : i32
    return %arg0, %arg1, %c0_i32, %c0_i32_0 : i32, i32, i32, i32
  }
  func.func @transform_3(%arg0: i32, %arg1: i32, %arg2: i32) -> (i32, i32, i32, i32) {
    %c0_i32 = arith.constant 0 : i32
    %c0_i32_0 = arith.constant 0 : i32
    %c0_i32_1 = arith.constant 0 : i32
    return %arg0, %arg1, %c0_i32, %c0_i32_0 : i32, i32, i32, i32
  }
  func.func @transform_4(%arg0: i32, %arg1: i32, %arg2: i32) -> (i32, i32, i32, i32) {
    %c0_i32 = arith.constant 0 : i32
    %c0_i32_0 = arith.constant 0 : i32
    %c0_i32_1 = arith.constant 0 : i32
    return %arg0, %arg1, %c0_i32, %c0_i32_0 : i32, i32, i32, i32
  }
}

</mosaic_0001>

<llo_original>
// kernel: tile.23
$region0: #{tile.23}
  #allocation0 [shape = 's32[1]{0}', space=sflag, size = 0x4, scoped, tag = 'scoped memory for tile.23']
  %s0 = inlined_call_operand.vmem [shape: f32[32], index: 0, kind: input, shape index: {}]
  %s1 = inlined_call_operand.vmem [shape: f32[4,32], index: 1, kind: output, shape index: {}]
  // Predicated region
  $region2: #{tile.23} parent=0 // pred_check
    _
  $region3: #{tile.23} parent=0 // pred_check_branch
    %3 = sbr.rel (0) target = $region5
  $region4: #{tile.23} parent=0 // pred_region
    _
  $region5: #{tile.23} parent=0 // pred_fallthru
    _
  %v4 = vld [vmem:[%s0] ss:$0 sm:$0xff]
  %5 = vst [vmem:[%s1] sm:$0xf] %v4

// kernel: tile.24
$region0: #{tile.24}
  %s0 = inlined_call_operand.vmem [shape: f32[4,32], index: 0, kind: input, shape index: {}]
  %s1 = inlined_call_operand.vmem [shape: f32[1,128], index: 1, kind: output, shape index: {}]
  $region1: #{tile.24} parent=0
    #allocation0 [shape = 'u8[4096]{0}', space=vmem, size = 0x1000, scoped, tag = 'scoped mem for output reshape']
    #allocation1 [shape = 'u8[4096]{0}', space=vmem, size = 0x1000, scoped, tag = 'scoped mem for input reshape']
    %s3 = sshllo.u32 0, 4
    %v4 = vld [vmem:[%s0] sm:%s3]
    %5 = vst [vmem:[#allocation1] sm:%s3] %v4
    %v6 = vld [vmem:[#allocation1] sm:$0x1]
    %vm7 = vcmask 261120
    %8 = vst.msk [vmem:[#allocation0] sm:$0x1] %vm7, %v6
    %s9 = scalar_lea.vmem [#allocation1], 3
    %v10 = vld [vmem:[%s9] sm:$0x1]
    %11 = vrot.lane.b32.xlu0 %v10, 96
    %v12 = vpop.permute.xlu0 %11
    %vm13 = vcmask 1048320
    %14 = vst.msk [vmem:[#allocation0] sm:$0x1] %vm13, %v12
    %s15 = scalar_lea.vmem [#allocation1], 2
    %v16 = vld [vmem:[%s15] sm:$0x1]
    %17 = vrot.lane.b32.xlu0 %v16, 64
    %v18 = vpop.permute.xlu0 %17
    %vm19 = vcmask 785920
    %20 = vst.msk [vmem:[#allocation0] sm:$0x1] %vm19, %v18
    %s21 = scalar_lea.vmem [#allocation1], 1
    %v22 = vld [vmem:[%s21] sm:$0x1]
    %23 = vrot.lane.b32.xlu0 %v22, 32
    %v24 = vpop.permute.xlu0 %23
    %vm25 = vcmask 523520
    %26 = vst.msk [vmem:[#allocation0] sm:$0x1] %vm25, %v24
    %s28 = sshllo.u32 0, 1
    %v30 = vld [vmem:[#allocation0] sm:%s28]
    %s31 = sshllo.u32 0, 1
    %32 = vst [vmem:[%s1] sm:%s31] %v30

// kernel: cnn_3d_forward.4
$region0: #{cnn_3d_forward.4}
  #allocation0 [shape = 'u32[]', space=smem, size = 0x4, offset = 0x4, fixed_abs, tag = 'smem constant byte address 0x4 - core index']
  #allocation1 [shape = 'u32[144,128]{1,0:T(1,128)}', space=vmem, size = 0x12000, scoped, tag = 'internal scratch']
  %s0 = inlined_call_operand.vmem [shape: bf16[2,12,64,25], index: 0, kind: input, shape index: {}]
  %s1 = inlined_call_operand.vmem [shape: bf16[5,25,32], index: 1, kind: input, shape index: {}]
  %s2 = inlined_call_operand.vmem [shape: f32[2,8,64,32], index: 2, kind: output, shape index: {0}]
  %s3 = inlined_call_operand.vmem [shape: f32[2,8,1,32], index: 3, kind: output, shape index: {1}]
  %s4 = inlined_call_operand.vmem [shape: f32[2,8,1,32], index: 4, kind: output, shape index: {2}]
  %5 = xla_tuple %s2, %s3, %s4
  %s6 = sld [smem:[#allocation0]]
  $region65: #{cnn_3d_forward.4} parent=0
    _
  %s8 = ssub.s32 1, %s6
  %s9 = scalar_select 0, %s8, %s6
  loop: start=0, step=1, limit=82
  $region2: #{cnn_3d_forward.4} parent=0 // loop_pre_header
    _
  $region3: #{cnn_3d_forward.4} parent=0 // loop_header
    %s11 = sphi 0, %s15
    %p12 = scmp.ge.s32.totalorder %s11, 82
    %s18 = sphi 0, %s37
    %s19 = sphi 0, %s33
    %s20 = sphi 0, %s29
    %s21 = sphi 0, %s18
    %s22 = sphi 0, %s19
    %s23 = sphi 0, %s20
    %s24 = sphi 0, %s21
    %s25 = sphi 0, %s22
    %s26 = sphi 0, %s23
    %s44 = sphi 0, %s46
    %s47 = sphi 0, %s44
    %s48 = sphi 0, %s47
    %s64 = sphi 0, %s48
    %s70 = sphi 0, %s72
    %s73 = sphi 0, %s70
    %s74 = sphi 0, %s73
    %s90 = sphi 0, %s74
    %s98 = sphi 0, %s100
    %s101 = sphi 0, %s98
    %s102 = sphi 0, %s101
    %s118 = sphi 0, %s102
    %s126 = sphi 0, %s128
    %s129 = sphi 0, %s126
    %s130 = sphi 0, %s129
    %s146 = sphi 0, %s130
    %s154 = sphi 0, %s156
    %s157 = sphi 0, %s154
    %s158 = sphi 0, %s157
    %s174 = sphi 0, %s158
  $region4: #{cnn_3d_forward.4} parent=0 // loop_header_branch
    %14 = sbr.rel (%p12) target = $region8
  $region5: #{cnn_3d_forward.4} parent=0 // loop_body
    %s16 = ssub.s32 %s11, 1
    %s17 = ssub.s32 %s11, 2
    %s27 = sadd.s32 1, %s20
    %p28 = scmp.ge.s32.totalorder %s27, 5
    %s29 = scalar_select %p28, 0, %s27
    %s30 = sadd.s32 1, %s19
    %s31 = scalar_select %p28, %s30, %s19
    %p32 = scmp.ge.s32.totalorder %s31, 8
    %s33 = scalar_select %p32, 0, %s31
    %s34 = sadd.s32 1, %s18
    %s35 = scalar_select %p32, %s34, %s18
    %p36 = scmp.ge.s32.totalorder %s35, 2
    %s37 = scalar_select %p36, 0, %s35
    %s38 = sadd.s32 %s19, %s20
    %s39 = sadd.s32 %s33, %s29
    %s40 = ssub.s32 %s18, %s37
    %s41 = ssub.s32 %s38, %s39
    %s42 = sor.u32 %s40, %s41
    %p43 = scmp.eq.s32.totalorder %s42, 0
    %s45 = sadd.s32 %s44, 1
    %s46 = scalar_select %p43, %s44, %s45
    %p49 = pneg %p43
    %p50 = scmp.eq.s32.totalorder %s11, 79
    %p51 = por %p49, %p50
    %p52 = scmp.ne.s32.totalorder %s44, %s47
    %p53 = scmp.eq.s32.totalorder %s11, 0
    %p54 = por %p52, %p53
    %p55 = scmp.ne.s32.totalorder %s44, %s47
    %p56 = scmp.eq.s32.totalorder %s16, 79
    %p57 = por %p55, %p56
    %p58 = scmp.ne.s32.totalorder %s47, %s48
    %p59 = scmp.eq.s32.totalorder %s16, 0
    %p60 = por %p58, %p59
    %p61 = scmp.ne.s32.totalorder %s47, %s48
    %p62 = scmp.eq.s32.totalorder %s17, 79
    %p63 = por %p61, %p62
    %p65 = scmp.ne.s32.totalorder %s48, %s64
    %p66 = scmp.eq.s32.totalorder %s17, 0
    %p67 = por %p65, %p66
    %s68 = ssub.s32 %s20, %s29
    %p69 = scmp.eq.s32.totalorder %s68, 0
    %s71 = sadd.s32 %s70, 1
    %s72 = scalar_select %p69, %s70, %s71
    %p75 = pneg %p69
    %p76 = scmp.eq.s32.totalorder %s11, 79
    %p77 = por %p75, %p76
    %p78 = scmp.ne.s32.totalorder %s70, %s73
    %p79 = scmp.eq.s32.totalorder %s11, 0
    %p80 = por %p78, %p79
    %p81 = scmp.ne.s32.totalorder %s70, %s73
    %p82 = scmp.eq.s32.totalorder %s16, 79
    %p83 = por %p81, %p82
    %p84 = scmp.ne.s32.totalorder %s73, %s74
    %p85 = scmp.eq.s32.totalorder %s16, 0
    %p86 = por %p84, %p85
    %p87 = scmp.ne.s32.totalorder %s73, %s74
    %p88 = scmp.eq.s32.totalorder %s17, 79
    %p89 = por %p87, %p88
    %p91 = scmp.ne.s32.totalorder %s74, %s90
    %p92 = scmp.eq.s32.totalorder %s17, 0
    %p93 = por %p91, %p92
    %s94 = ssub.s32 %s18, %s37
    %s95 = ssub.s32 %s19, %s33
    %s96 = sor.u32 %s94, %s95
    %p97 = scmp.eq.s32.totalorder %s96, 0
    %s99 = sadd.s32 %s98, 1
    %s100 = scalar_select %p97, %s98, %s99
    %p103 = pneg %p97
    %p104 = scmp.eq.s32.totalorder %s11, 79
    %p105 = por %p103, %p104
    %p106 = scmp.ne.s32.totalorder %s98, %s101
    %p107 = scmp.eq.s32.totalorder %s11, 0
    %p108 = por %p106, %p107
    %p109 = scmp.ne.s32.totalorder %s98, %s101
    %p110 = scmp.eq.s32.totalorder %s16, 79
    %p111 = por %p109, %p110
    %p112 = scmp.ne.s32.totalorder %s101, %s102
    %p113 = scmp.eq.s32.totalorder %s16, 0
    %p114 = por %p112, %p113
    %p115 = scmp.ne.s32.totalorder %s101, %s102
    %p116 = scmp.eq.s32.totalorder %s17, 79
    %p117 = por %p115, %p116
    %p119 = scmp.ne.s32.totalorder %s102, %s118
    %p120 = scmp.eq.s32.totalorder %s17, 0
    %p121 = por %p119, %p120
    %s122 = ssub.s32 %s18, %s37
    %s123 = ssub.s32 %s19, %s33
    %s124 = sor.u32 %s122, %s123
    %p125 = scmp.eq.s32.totalorder %s124, 0
    %s127 = sadd.s32 %s126, 1
    %s128 = scalar_select %p125, %s126, %s127
    %p131 = pneg %p125
    %p132 = scmp.eq.s32.totalorder %s11, 79
    %p133 = por %p131, %p132
    %p134 = scmp.ne.s32.totalorder %s126, %s129
    %p135 = scmp.eq.s32.totalorder %s11, 0
    %p136 = por %p134, %p135
    %p137 = scmp.ne.s32.totalorder %s126, %s129
    %p138 = scmp.eq.s32.totalorder %s16, 79
    %p139 = por %p137, %p138
    %p140 = scmp.ne.s32.totalorder %s129, %s130
    %p141 = scmp.eq.s32.totalorder %s16, 0
    %p142 = por %p140, %p141
    %p143 = scmp.ne.s32.totalorder %s129, %s130
    %p144 = scmp.eq.s32.totalorder %s17, 79
    %p145 = por %p143, %p144
    %p147 = scmp.ne.s32.totalorder %s130, %s146
    %p148 = scmp.eq.s32.totalorder %s17, 0
    %p149 = por %p147, %p148
    %s150 = ssub.s32 %s18, %s37
    %s151 = ssub.s32 %s19, %s33
    %s152 = sor.u32 %s150, %s151
    %p153 = scmp.eq.s32.totalorder %s152, 0
    %s155 = sadd.s32 %s154, 1
    %s156 = scalar_select %p153, %s154, %s155
    %p159 = pneg %p153
    %p160 = scmp.eq.s32.totalorder %s11, 79
    %p161 = por %p159, %p160
    %p162 = scmp.ne.s32.totalorder %s154, %s157
    %p163 = scmp.eq.s32.totalorder %s11, 0
    %p164 = por %p162, %p163
    %p165 = scmp.ne.s32.totalorder %s154, %s157
    %p166 = scmp.eq.s32.totalorder %s16, 79
    %p167 = por %p165, %p166
    %p168 = scmp.ne.s32.totalorder %s157, %s158
    %p169 = scmp.eq.s32.totalorder %s16, 0
    %p170 = por %p168, %p169
    %p171 = scmp.ne.s32.totalorder %s157, %s158
    %p172 = scmp.eq.s32.totalorder %s17, 79
    %p173 = por %p171, %p172
    %p175 = scmp.ne.s32.totalorder %s158, %s174
    %p176 = scmp.eq.s32.totalorder %s17, 0
    %p177 = por %p175, %p176
    %p178 = scmp.le.s32.totalorder 1, %s11
    %p179 = scmp.lt.s32.totalorder %s11, 81
    %p180 = pnand %p178, %p179
    %p181 = pneg %p180
    // Predicated region
    $region9: #{cnn_3d_forward.4} parent=5 // pred_check
      _
    $region10: #{cnn_3d_forward.4} parent=5 // pred_check_branch
      %183 = sbr.rel (%p180) target = $region12
    $region11: #{cnn_3d_forward.4} parent=5 // pred_region
      %s184 = ssub.s32 %s11, 1
    $region12: #{cnn_3d_forward.4} parent=5 // pred_fallthru
      _
    %p185 = scmp.lt.s32.totalorder %s11, 80
    // Predicated region
    $region13: #{cnn_3d_forward.4} parent=5 // pred_check
      %p186 = pneg %p185
    $region14: #{cnn_3d_forward.4} parent=5 // pred_check_branch
      %188 = sbr.rel (%p186) target = $region16
    $region15: #{cnn_3d_forward.4} parent=5 // pred_region
      // Predicated region
      $region17: #{cnn_3d_forward.4} parent=15 // pred_check
        %p189 = pneg %p54
      $region18: #{cnn_3d_forward.4} parent=15 // pred_check_branch
        %191 = sbr.rel (%p189) target = $region20
      $region19: #{cnn_3d_forward.4} parent=15 // pred_region
        %s192 = sadd.s32 %s19, %s20
        %p193 = scmp.lt.s32.totalorder %s18, 1
        %s194 = scalar_select %p193, %s18, 1
        %p195 = scmp.lt.s32.totalorder %s192, 11
        %s196 = scalar_select %p195, %s192, 11
        %s197 = smul.addr %s196, 8
        %s198 = smul.addr %s194, 96
        %s199 = sadd.s32 %s197, %s198
        %s200 = smul.addr %s199, 4
        %s201 = scalar_lea.vmem %s0, %s200
        %s202 = sadd.s32 %s19, %s20
      $region20: #{cnn_3d_forward.4} parent=15 // pred_fallthru
        _
      // Predicated region
      $region21: #{cnn_3d_forward.4} parent=15 // pred_check
        %p203 = pneg %p80
      $region22: #{cnn_3d_forward.4} parent=15 // pred_check_branch
        %205 = sbr.rel (%p203) target = $region24
      $region23: #{cnn_3d_forward.4} parent=15 // pred_region
        %p206 = scmp.lt.s32.totalorder %s20, 4
        %s207 = scalar_select %p206, %s20, 4
        %s208 = smul.addr %s207, 4
        %s209 = smul.addr %s208, 4
        %s210 = scalar_lea.vmem %s1, %s209
      $region24: #{cnn_3d_forward.4} parent=15 // pred_fallthru
        _
    $region16: #{cnn_3d_forward.4} parent=5 // pred_fallthru
      _
    %p211 = scmp.le.s32.totalorder 1, %s11
    %p212 = scmp.lt.s32.totalorder %s11, 81
    %p213 = pnand %p211, %p212
    %p214 = pneg %p213
    // Predicated region
    $region25: #{cnn_3d_forward.4} parent=5 // pred_check
      _
    $region26: #{cnn_3d_forward.4} parent=5 // pred_check_branch
      %216 = sbr.rel (%p213) target = $region28
    $region27: #{cnn_3d_forward.4} parent=5 // pred_region
      %s217 = ssub.s32 %s11, 1
      %s218 = sadd.s32 %s22, %s23
      %p219 = scmp.lt.s32.totalorder %s21, 1
      %s220 = scalar_select %p219, %s21, 1
      %p221 = scmp.lt.s32.totalorder %s218, 11
      %s222 = scalar_select %p221, %s218, 11
      %s223 = smul.addr %s222, 8
      %s224 = smul.addr %s220, 96
      %s225 = sadd.s32 %s223, %s224
      %s226 = smul.addr %s225, 4
      %s227 = scalar_lea.vmem %s0, %s226
      %p228 = pneg %p60
      %p229 = pneg %p57
      %p230 = scmp.lt.s32.totalorder %s23, 4
      %s231 = scalar_select %p230, %s23, 4
      %s232 = smul.addr %s231, 4
      %s233 = smul.addr %s232, 4
      %s234 = scalar_lea.vmem %s1, %s233
      %p235 = pneg %p86
      %p236 = pneg %p83
      %p237 = pneg %p114
      %p238 = pneg %p111
      %p239 = scmp.lt.s32.totalorder %s21, 1
      %s240 = scalar_select %p239, %s21, 1
      %p241 = scmp.lt.s32.totalorder %s22, 7
      %s242 = scalar_select %p241, %s22, 7
      %s243 = smul.addr %s242, 8
      %s244 = smul.addr %s240, 64
      %s245 = sadd.s32 %s243, %s244
      %s246 = smul.addr %s245, 8
      %s247 = scalar_lea.vmem %s2, %s246
      %p248 = pneg %p142
      %p249 = pneg %p139
      %p250 = scmp.lt.s32.totalorder %s21, 1
      %s251 = scalar_select %p250, %s21, 1
      %p252 = scmp.lt.s32.totalorder %s22, 7
      %s253 = scalar_select %p252, %s22, 7
      %s254 = smul.addr %s251, 8
      %s255 = sadd.s32 %s253, %s254
      %s256 = scalar_lea.vmem %s3, %s255
      %p257 = pneg %p170
      %p258 = pneg %p167
      %p259 = scmp.lt.s32.totalorder %s21, 1
      %s260 = scalar_select %p259, %s21, 1
      %p261 = scmp.lt.s32.totalorder %s22, 7
      %s262 = scalar_select %p261, %s22, 7
      %s263 = smul.addr %s260, 8
      %s264 = sadd.s32 %s262, %s263
      %s265 = scalar_lea.vmem %s4, %s264
      %s266 = sadd.s32 %s22, %s23
      %p267 = scmp.lt.s32.totalorder %s21, 1
      %s268 = scalar_select %p267, %s21, 1
      %p269 = scmp.lt.s32.totalorder %s266, 11
      %s270 = scalar_select %p269, %s266, 11
      %s271 = smul.addr %s270, 8
      %s272 = smul.addr %s268, 96
      %s273 = sadd.s32 %s271, %s272
      %s274 = smul.addr %s273, 4
      %s275 = scalar_lea.vmem %s0, %s274
      %s276 = sadd.s32 %s22, %s23
      %p277 = scmp.lt.s32.totalorder %s23, 4
      %s278 = scalar_select %p277, %s23, 4
      %s279 = smul.addr %s278, 4
      %s280 = smul.addr %s279, 4
      %s281 = scalar_lea.vmem %s1, %s280
      %p282 = scmp.lt.s32.totalorder %s21, 1
      %s283 = scalar_select %p282, %s21, 1
      %p284 = scmp.lt.s32.totalorder %s22, 7
      %s285 = scalar_select %p284, %s22, 7
      %s286 = smul.addr %s285, 8
      %s287 = smul.addr %s283, 64
      %s288 = sadd.s32 %s286, %s287
      %s289 = smul.addr %s288, 8
      %s290 = scalar_lea.vmem %s2, %s289
      %p291 = scmp.lt.s32.totalorder %s21, 1
      %s292 = scalar_select %p291, %s21, 1
      %p293 = scmp.lt.s32.totalorder %s22, 7
      %s294 = scalar_select %p293, %s22, 7
      %s295 = smul.addr %s292, 8
      %s296 = sadd.s32 %s294, %s295
      %s297 = scalar_lea.vmem %s3, %s296
      %p298 = scmp.lt.s32.totalorder %s21, 1
      %s299 = scalar_select %p298, %s21, 1
      %p300 = scmp.lt.s32.totalorder %s22, 7
      %s301 = scalar_select %p300, %s22, 7
      %s302 = smul.addr %s299, 8
      %s303 = sadd.s32 %s301, %s302
      %s304 = scalar_lea.vmem %s4, %s303
      %p306 = scmp.eq.s32.totalorder %s23, 0
      // Predicated region
      $region29: #{cnn_3d_forward.4} parent=27 // pred_check
        %p307 = pneg %p306
      $region30: #{cnn_3d_forward.4} parent=27 // pred_check_branch
        %309 = sbr.rel (%p307) target = $region32
      $region31: #{cnn_3d_forward.4} parent=27 // pred_region
        %vm310 = vcmask 261120
        %311 = vst.msk [vmem:[%s290] sm:$0xff] %vm310, 0.0
        %312 = vst.msk [vmem:[%s290 + $0x8] sm:$0xff] %vm310, 0.0
        %313 = vst.msk [vmem:[%s290 + $0x10] sm:$0xff] %vm310, 0.0
        %314 = vst.msk [vmem:[%s290 + $0x18] sm:$0xff] %vm310, 0.0
        %315 = vst.msk [vmem:[%s290 + $0x20] sm:$0xff] %vm310, 0.0
        %316 = vst.msk [vmem:[%s290 + $0x28] sm:$0xff] %vm310, 0.0
        %317 = vst.msk [vmem:[%s290 + $0x30] sm:$0xff] %vm310, 0.0
        %318 = vst.msk [vmem:[%s290 + $0x38] sm:$0xff] %vm310, 0.0
      $region32: #{cnn_3d_forward.4} parent=27 // pred_fallthru
        _
      %v319 = vld [vmem:[%s290] sm:$0xff]
      %v320 = vld [vmem:[%s290 + $0x8] sm:$0xff]
      %v321 = vld [vmem:[%s290 + $0x10] sm:$0xff]
      %v322 = vld [vmem:[%s290 + $0x18] sm:$0xff]
      %v323 = vld [vmem:[%s290 + $0x20] sm:$0xff]
      %v324 = vld [vmem:[%s290 + $0x28] sm:$0xff]
      %v325 = vld [vmem:[%s290 + $0x30] sm:$0xff]
      %v326 = vld [vmem:[%s290 + $0x38] sm:$0xff]
      %v327 = vld [vmem:[%s275] sm:$0xf]
      %v328 = vld [vmem:[%s275 + $0x4] sm:$0xf]
      %v329 = vld [vmem:[%s275 + $0x8] sm:$0xf]
      %v330 = vld [vmem:[%s275 + $0xc] sm:$0xf]
      %v331 = vld [vmem:[%s275 + $0x10] sm:$0xf]
      %v332 = vld [vmem:[%s275 + $0x14] sm:$0xf]
      %v333 = vld [vmem:[%s275 + $0x18] sm:$0xf]
      %v334 = vld [vmem:[%s275 + $0x1c] sm:$0xf]
      %v335 = vld [vmem:[%s281] sm:$0xf]
      %v336 = vld [vmem:[%s281 + $0x4] sm:$0xf]
      %v337 = vld [vmem:[%s281 + $0x8] sm:$0xf]
      %v338 = vld [vmem:[%s281 + $0xc] sm:$0x1]
      %v347 = vunpack.c.l.b16 %v327
      %v348 = vunpack.c.l.b16 %v328
      %v349 = vunpack.c.l.b16 %v329
      %v350 = vunpack.c.l.b16 %v330
      %v351 = vunpack.c.l.b16 %v331
      %v352 = vunpack.c.l.b16 %v332
      %v353 = vunpack.c.l.b16 %v333
      %v354 = vunpack.c.l.b16 %v334
      %v355 = vpack.c.b16 %v348, %v347
      %v356 = vpack.c.b16 %v350, %v349
      %v357 = vpack.c.b16 %v352, %v351
      %v358 = vpack.c.b16 %v354, %v353
      %v363 = vunpack.c.l.b16 %v335
      %v364 = vunpack.c.l.b16 %v336
      %v365 = vunpack.c.l.b16 %v337
      %v366 = vunpack.c.l.b16 %v338
      %v367 = vpack.c.b16 %v364, %v363
      %v368 = vpack.c.b16 %v366, %v365
      %vm370 = vcmask 203776
      %v372 = vsel %vm370, %v355, 0
      %v375 = vsel %vm370, %v356, 0
      %v378 = vsel %vm370, %v357, 0
      %v381 = vsel %vm370, %v358, 0
      %vm383 = vcmask 1043456
      %vm384 = vcmask 1044480
      %v385 = vsel %vm383, 4294967295, 65535
      %v386 = vsel %vm384, %v385, 0
      %v388 = vand.u32 %v368, %v386
      %390 = vmatprep.subr.bf16.mxu0 0
      %391 = vmatpush1.bf16.msra.mxu0 %v367
      %392 = vmatprep.subr.bf16.mxu0 0
      %393 = vmatpush1.bf16.msra.mxu0 %v388
      %394 = vmatprep.subr.bf16.mxu0 0
      %395 = vmatpush1.bf16.msra.mxu0 0
      %396 = vmatprep.subr.bf16.mxu0 0
      %397 = vmatpush1.bf16.msra.mxu0 0
      %398 = vmatprep.subr.bf16.mxu0 0
      %399 = vmatpush1.bf16.msra.mxu0 0
      %400 = vmatprep.subr.bf16.mxu0 0
      %401 = vmatpush1.bf16.msra.mxu0 0
      %402 = vmatprep.subr.bf16.mxu0 0
      %403 = vmatpush1.bf16.msra.mxu0 0
      %404 = vmatprep.subr.bf16.mxu0 0
      %405 = vmatpush1.bf16.msra.mxu0 0
      %406 = vmatprep.subr.bf16.mxu0 0
      %407 = vmatpush1.bf16.msra.mxu0 0
      %408 = vmatprep.subr.bf16.mxu0 0
      %409 = vmatpush1.bf16.msra.mxu0 0
      %410 = vmatprep.subr.bf16.mxu0 0
      %411 = vmatpush1.bf16.msra.mxu0 0
      %412 = vmatprep.subr.bf16.mxu0 0
      %413 = vmatpush1.bf16.msra.mxu0 0
      %414 = vmatprep.subr.bf16.mxu0 0
      %415 = vmatpush1.bf16.msra.mxu0 0
      %416 = vmatprep.subr.bf16.mxu0 0
      %417 = vmatpush1.bf16.msra.mxu0 0
      %418 = vmatprep.subr.bf16.mxu0 0
      %419 = vmatpush1.bf16.msra.mxu0 0
      %420 = vmatprep.subr.bf16.mxu0 0
      %421 = vmatpush1.bf16.msra.mxu0 0
      %422 = vmatprep.mubr.bf16.mxu0 0
      %423 = vmatmul.mubr.bf16.gmra.mrb[0].mxu0 %v372
      %v424 = vpop.f32.mrb[0].mxu0
      %v425 = vadd.f32 0.0, %v424
      %v426 = vpop.f32.mrb[0].mxu0
      %v427 = vpop.f32.mrb[0].mxu0
      %v428 = vadd.f32 0.0, %v427
      %v429 = vpop.f32.mrb[0].mxu0
      %430 = vmatprep.mubr.bf16.mxu0 0
      %431 = vmatmul.mubr.bf16.gmra.mrb[0].mxu0 %v375
      %v432 = vpop.f32.mrb[0].mxu0
      %v433 = vadd.f32 0.0, %v432
      %v434 = vpop.f32.mrb[0].mxu0
      %v435 = vpop.f32.mrb[0].mxu0
      %v436 = vadd.f32 0.0, %v435
      %v437 = vpop.f32.mrb[0].mxu0
      %438 = vmatprep.mubr.bf16.mxu0 0
      %439 = vmatmul.mubr.bf16.gmra.mrb[0].mxu0 %v378
      %v440 = vpop.f32.mrb[0].mxu0
      %v441 = vadd.f32 0.0, %v440
      %v442 = vpop.f32.mrb[0].mxu0
      %v443 = vpop.f32.mrb[0].mxu0
      %v444 = vadd.f32 0.0, %v443
      %v445 = vpop.f32.mrb[0].mxu0
      %446 = vmatprep.mubr.bf16.mxu0 0
      %447 = vmatmul.mubr.bf16.gmra.mrb[0].mxu0 %v381
      %v448 = vpop.f32.mrb[0].mxu0
      %v449 = vadd.f32 0.0, %v448
      %v450 = vpop.f32.mrb[0].mxu0
      %v451 = vpop.f32.mrb[0].mxu0
      %v452 = vadd.f32 0.0, %v451
      %v453 = vpop.f32.mrb[0].mxu0
      %454 = vdwg.mxu0
      %v455 = vadd.f32 %v319, %v425
      %v456 = vadd.f32 %v320, %v428
      %v457 = vadd.f32 %v321, %v433
      %v458 = vadd.f32 %v322, %v436
      %v459 = vadd.f32 %v323, %v441
      %v460 = vadd.f32 %v324, %v444
      %v461 = vadd.f32 %v325, %v449
      %v462 = vadd.f32 %v326, %v452
      %vm463 = vcmask 261120
      %464 = vst.msk [vmem:[%s290] sm:$0xff] %vm463, %v455
      %465 = vst.msk [vmem:[%s290 + $0x8] sm:$0xff] %vm463, %v456
      %466 = vst.msk [vmem:[%s290 + $0x10] sm:$0xff] %vm463, %v457
      %467 = vst.msk [vmem:[%s290 + $0x18] sm:$0xff] %vm463, %v458
      %468 = vst.msk [vmem:[%s290 + $0x20] sm:$0xff] %vm463, %v459
      %469 = vst.msk [vmem:[%s290 + $0x28] sm:$0xff] %vm463, %v460
      %470 = vst.msk [vmem:[%s290 + $0x30] sm:$0xff] %vm463, %v461
      %471 = vst.msk [vmem:[%s290 + $0x38] sm:$0xff] %vm463, %v462
      %p472 = scmp.eq.s32.totalorder %s23, 4
      // Predicated region
      $region33: #{cnn_3d_forward.4} parent=27 // pred_check
        %p473 = pneg %p472
      $region34: #{cnn_3d_forward.4} parent=27 // pred_check_branch
        %475 = sbr.rel (%p473) target = $region36
      $region35: #{cnn_3d_forward.4} parent=27 // pred_region
        %v476 = vld [vmem:[%s290] sm:$0xff]
        %v477 = vld [vmem:[%s290 + $0x8] sm:$0xff]
        %v478 = vld [vmem:[%s290 + $0x10] sm:$0xff]
        %v479 = vld [vmem:[%s290 + $0x18] sm:$0xff]
        %v480 = vld [vmem:[%s290 + $0x20] sm:$0xff]
        %v481 = vld [vmem:[%s290 + $0x28] sm:$0xff]
        %v482 = vld [vmem:[%s290 + $0x30] sm:$0xff]
        %v483 = vld [vmem:[%s290 + $0x38] sm:$0xff]
        %v484 = vsel %vm463, %v476, 0.0
        %v485 = vsel %vm463, %v477, 0.0
        %v486 = vadd.f32 %v484, %v485
        %v487 = vsel %vm463, %v478, 0.0
        %v488 = vadd.f32 %v486, %v487
        %v489 = vsel %vm463, %v479, 0.0
        %v490 = vadd.f32 %v488, %v489
        %v491 = vsel %vm463, %v480, 0.0
        %v492 = vadd.f32 %v490, %v491
        %v493 = vsel %vm463, %v481, 0.0
        %v494 = vadd.f32 %v492, %v493
        %v495 = vsel %vm463, %v482, 0.0
        %v496 = vadd.f32 %v494, %v495
        %v497 = vsel %vm463, %v483, 0.0
        %v498 = vadd.f32 %v496, %v497
        %v499 = vrot.slane %v498, 4
        %v500 = vadd.f32 %v498, %v499
        %v501 = vrot.slane %v500, 2
        %v502 = vadd.f32 %v500, %v501
        %v503 = vrot.slane %v502, 1
        %v504 = vadd.f32 %v502, %v503
        %vm505 = vcmask 253952
        %506 = vst.msk [vmem:[%s297] sm:$0x1] %vm505, %v504
        %v507 = vmul.f32 %v476, %v476
        %v508 = vmul.f32 %v477, %v477
        %v509 = vmul.f32 %v478, %v478
        %v510 = vmul.f32 %v479, %v479
        %v511 = vmul.f32 %v480, %v480
        %v512 = vmul.f32 %v481, %v481
        %v513 = vmul.f32 %v482, %v482
        %v514 = vmul.f32 %v483, %v483
        %v515 = vsel %vm463, %v507, 0.0
        %v516 = vsel %vm463, %v508, 0.0
        %v517 = vadd.f32 %v515, %v516
        %v518 = vsel %vm463, %v509, 0.0
        %v519 = vadd.f32 %v517, %v518
        %v520 = vsel %vm463, %v510, 0.0
        %v521 = vadd.f32 %v519, %v520
        %v522 = vsel %vm463, %v511, 0.0
        %v523 = vadd.f32 %v521, %v522
        %v524 = vsel %vm463, %v512, 0.0
        %v525 = vadd.f32 %v523, %v524
        %v526 = vsel %vm463, %v513, 0.0
        %v527 = vadd.f32 %v525, %v526
        %v528 = vsel %vm463, %v514, 0.0
        %v529 = vadd.f32 %v527, %v528
        %v530 = vrot.slane %v529, 4
        %v531 = vadd.f32 %v529, %v530
        %v532 = vrot.slane %v531, 2
        %v533 = vadd.f32 %v531, %v532
        %v534 = vrot.slane %v533, 1
        %v535 = vadd.f32 %v533, %v534
        %536 = vst.msk [vmem:[%s304] sm:$0x1] %vm505, %v535
      $region36: #{cnn_3d_forward.4} parent=27 // pred_fallthru
        _
      %p537 = scmp.lt.s32.totalorder %s21, 1
      %s538 = scalar_select %p537, %s21, 1
      %p539 = scmp.lt.s32.totalorder %s22, 7
      %s540 = scalar_select %p539, %s22, 7
      %s541 = smul.addr %s540, 8
      %s542 = smul.addr %s538, 64
      %s543 = sadd.s32 %s541, %s542
      %s544 = smul.addr %s543, 8
      %s545 = scalar_lea.vmem %s2, %s544
      %p546 = scmp.lt.s32.totalorder %s21, 1
      %s547 = scalar_select %p546, %s21, 1
      %p548 = scmp.lt.s32.totalorder %s22, 7
      %s549 = scalar_select %p548, %s22, 7
      %s550 = smul.addr %s547, 8
      %s551 = sadd.s32 %s549, %s550
      %s552 = scalar_lea.vmem %s3, %s551
      %p553 = scmp.lt.s32.totalorder %s21, 1
      %s554 = scalar_select %p553, %s21, 1
      %p555 = scmp.lt.s32.totalorder %s22, 7
      %s556 = scalar_select %p555, %s22, 7
      %s557 = smul.addr %s554, 8
      %s558 = sadd.s32 %s556, %s557
      %s559 = scalar_lea.vmem %s4, %s558
      // Predicated region
      $region37: #{cnn_3d_forward.4} parent=27 // pred_check
        %p560 = pneg %p111
      $region38: #{cnn_3d_forward.4} parent=27 // pred_check_branch
        %562 = sbr.rel (%p560) target = $region40
      $region39: #{cnn_3d_forward.4} parent=27 // pred_region
        _
      $region40: #{cnn_3d_forward.4} parent=27 // pred_fallthru
        _
      // Predicated region
      $region41: #{cnn_3d_forward.4} parent=27 // pred_check
        %p563 = pneg %p139
      $region42: #{cnn_3d_forward.4} parent=27 // pred_check_branch
        %565 = sbr.rel (%p563) target = $region44
      $region43: #{cnn_3d_forward.4} parent=27 // pred_region
        _
      $region44: #{cnn_3d_forward.4} parent=27 // pred_fallthru
        _
      // Predicated region
      $region45: #{cnn_3d_forward.4} parent=27 // pred_check
        %p566 = pneg %p167
      $region46: #{cnn_3d_forward.4} parent=27 // pred_check_branch
        %568 = sbr.rel (%p566) target = $region48
      $region47: #{cnn_3d_forward.4} parent=27 // pred_region
        _
      $region48: #{cnn_3d_forward.4} parent=27 // pred_fallthru
        _
    $region28: #{cnn_3d_forward.4} parent=5 // pred_fallthru
      _
    %p569 = scmp.le.s32.totalorder 2, %s11
    // Predicated region
    $region49: #{cnn_3d_forward.4} parent=5 // pred_check
      %p570 = pneg %p569
    $region50: #{cnn_3d_forward.4} parent=5 // pred_check_branch
      %572 = sbr.rel (%p570) target = $region52
    $region51: #{cnn_3d_forward.4} parent=5 // pred_region
      %s573 = ssub.s32 %s11, 2
      // Predicated region
      $region53: #{cnn_3d_forward.4} parent=51 // pred_check
        %p574 = pneg %p117
      $region54: #{cnn_3d_forward.4} parent=51 // pred_check_branch
        %576 = sbr.rel (%p574) target = $region56
      $region55: #{cnn_3d_forward.4} parent=51 // pred_region
        %p577 = scmp.lt.s32.totalorder %s24, 1
        %s578 = scalar_select %p577, %s24, 1
        %p579 = scmp.lt.s32.totalorder %s25, 7
        %s580 = scalar_select %p579, %s25, 7
        %s581 = smul.addr %s580, 8
        %s582 = smul.addr %s578, 64
        %s583 = sadd.s32 %s581, %s582
        %s584 = smul.addr %s583, 8
        %s585 = scalar_lea.vmem %s2, %s584
      $region56: #{cnn_3d_forward.4} parent=51 // pred_fallthru
        _
      // Predicated region
      $region57: #{cnn_3d_forward.4} parent=51 // pred_check
        %p586 = pneg %p145
      $region58: #{cnn_3d_forward.4} parent=51 // pred_check_branch
        %588 = sbr.rel (%p586) target = $region60
      $region59: #{cnn_3d_forward.4} parent=51 // pred_region
        %p589 = scmp.lt.s32.totalorder %s24, 1
        %s590 = scalar_select %p589, %s24, 1
        %p591 = scmp.lt.s32.totalorder %s25, 7
        %s592 = scalar_select %p591, %s25, 7
        %s593 = smul.addr %s590, 8
        %s594 = sadd.s32 %s592, %s593
        %s595 = scalar_lea.vmem %s3, %s594
      $region60: #{cnn_3d_forward.4} parent=51 // pred_fallthru
        _
      // Predicated region
      $region61: #{cnn_3d_forward.4} parent=51 // pred_check
        %p596 = pneg %p173
      $region62: #{cnn_3d_forward.4} parent=51 // pred_check_branch
        %598 = sbr.rel (%p596) target = $region64
      $region63: #{cnn_3d_forward.4} parent=51 // pred_region
        %p599 = scmp.lt.s32.totalorder %s24, 1
        %s600 = scalar_select %p599, %s24, 1
        %p601 = scmp.lt.s32.totalorder %s25, 7
        %s602 = scalar_select %p601, %s25, 7
        %s603 = smul.addr %s600, 8
        %s604 = sadd.s32 %s602, %s603
        %s605 = scalar_lea.vmem %s4, %s604
      $region64: #{cnn_3d_forward.4} parent=51 // pred_fallthru
        _
    $region52: #{cnn_3d_forward.4} parent=5 // pred_fallthru
      _
  $region6: #{cnn_3d_forward.4} parent=0 // loop_footer
    %s15 = sadd.s32 1, %s11
  $region7: #{cnn_3d_forward.4} parent=0 // loop_footer_branch
    %10 = sbr.rel target = $region3
  $region8: #{cnn_3d_forward.4} parent=0 // loop_exit
    _

// kernel: cnn_3d_forward.5
$region0: #{cnn_3d_forward.5}
  #allocation0 [shape = 'u32[]', space=smem, size = 0x4, offset = 0x4, fixed_abs, tag = 'smem constant byte address 0x4 - core index']
  #allocation1 [shape = 'u32[144,128]{1,0:T(1,128)}', space=vmem, size = 0x12000, scoped, tag = 'internal scratch']
  %s0 = inlined_call_operand.vmem [shape: f32[16,16,128], index: 0, kind: input, shape index: {}]
  %s1 = inlined_call_operand.vmem [shape: f32[1,128], index: 1, kind: input, shape index: {}]
  %s2 = inlined_call_operand.vmem [shape: f32[1,128], index: 2, kind: input, shape index: {}]
  %s3 = inlined_call_operand.vmem [shape: f32[16,16,128], index: 3, kind: output, shape index: {}]
  %s4 = sld [smem:[#allocation0]]
  $region45: #{cnn_3d_forward.5} parent=0
    _
  %s6 = ssub.s32 1, %s4
  %s7 = scalar_select 0, %s6, %s4
  loop: start=0, step=1, limit=18
  $region2: #{cnn_3d_forward.5} parent=0 // loop_pre_header
    _
  $region3: #{cnn_3d_forward.5} parent=0 // loop_header
    %s9 = sphi 0, %s13
    %p10 = scmp.ge.s32.totalorder %s9, 18
    %s19 = sphi 0, %s21
    %s22 = sphi 0, %s19
    %s23 = sphi 0, %s22
    %s39 = sphi 0, %s23
    %s43 = sphi 0, %s43
    %s45 = sphi 0, %s43
    %s46 = sphi 0, %s45
    %s60 = sphi 0, %s46
    %s64 = sphi 0, %s64
    %s66 = sphi 0, %s64
    %s67 = sphi 0, %s66
    %s81 = sphi 0, %s67
    %s87 = sphi 0, %s89
    %s90 = sphi 0, %s87
    %s91 = sphi 0, %s90
    %s107 = sphi 0, %s91
  $region4: #{cnn_3d_forward.5} parent=0 // loop_header_branch
    %12 = sbr.rel (%p10) target = $region8
  $region5: #{cnn_3d_forward.5} parent=0 // loop_body
    %s14 = ssub.s32 %s9, 1
    %s15 = ssub.s32 %s9, 2
    %s16 = sadd.s32 %s9, 1
    %s17 = ssub.s32 %s9, %s16
    %p18 = scmp.eq.s32.totalorder %s17, 0
    %s20 = sadd.s32 %s19, 1
    %s21 = scalar_select %p18, %s19, %s20
    %p24 = pneg %p18
    %p25 = scmp.eq.s32.totalorder %s9, 15
    %p26 = por %p24, %p25
    %p27 = scmp.ne.s32.totalorder %s19, %s22
    %p28 = scmp.eq.s32.totalorder %s9, 0
    %p29 = por %p27, %p28
    %p30 = scmp.ne.s32.totalorder %s19, %s22
    %p31 = scmp.eq.s32.totalorder %s14, 15
    %p32 = por %p30, %p31
    %p33 = scmp.ne.s32.totalorder %s22, %s23
    %p34 = scmp.eq.s32.totalorder %s14, 0
    %p35 = por %p33, %p34
    %p36 = scmp.ne.s32.totalorder %s22, %s23
    %p37 = scmp.eq.s32.totalorder %s15, 15
    %p38 = por %p36, %p37
    %p40 = scmp.ne.s32.totalorder %s23, %s39
    %p41 = scmp.eq.s32.totalorder %s15, 0
    %p42 = por %p40, %p41
    %s44 = sadd.s32 %s43, 1
    %p47 = scmp.eq.s32.totalorder %s9, 15
    %p48 = scmp.ne.s32.totalorder %s43, %s45
    %p49 = scmp.eq.s32.totalorder %s9, 0
    %p50 = por %p48, %p49
    %p51 = scmp.ne.s32.totalorder %s43, %s45
    %p52 = scmp.eq.s32.totalorder %s14, 15
    %p53 = por %p51, %p52
    %p54 = scmp.ne.s32.totalorder %s45, %s46
    %p55 = scmp.eq.s32.totalorder %s14, 0
    %p56 = por %p54, %p55
    %p57 = scmp.ne.s32.totalorder %s45, %s46
    %p58 = scmp.eq.s32.totalorder %s15, 15
    %p59 = por %p57, %p58
    %p61 = scmp.ne.s32.totalorder %s46, %s60
    %p62 = scmp.eq.s32.totalorder %s15, 0
    %p63 = por %p61, %p62
    %s65 = sadd.s32 %s64, 1
    %p68 = scmp.eq.s32.totalorder %s9, 15
    %p69 = scmp.ne.s32.totalorder %s64, %s66
    %p70 = scmp.eq.s32.totalorder %s9, 0
    %p71 = por %p69, %p70
    %p72 = scmp.ne.s32.totalorder %s64, %s66
    %p73 = scmp.eq.s32.totalorder %s14, 15
    %p74 = por %p72, %p73
    %p75 = scmp.ne.s32.totalorder %s66, %s67
    %p76 = scmp.eq.s32.totalorder %s14, 0
    %p77 = por %p75, %p76
    %p78 = scmp.ne.s32.totalorder %s66, %s67
    %p79 = scmp.eq.s32.totalorder %s15, 15
    %p80 = por %p78, %p79
    %p82 = scmp.ne.s32.totalorder %s67, %s81
    %p83 = scmp.eq.s32.totalorder %s15, 0
    %p84 = por %p82, %p83
    %s85 = ssub.s32 %s9, %s16
    %p86 = scmp.eq.s32.totalorder %s85, 0
    %s88 = sadd.s32 %s87, 1
    %s89 = scalar_select %p86, %s87, %s88
    %p92 = pneg %p86
    %p93 = scmp.eq.s32.totalorder %s9, 15
    %p94 = por %p92, %p93
    %p95 = scmp.ne.s32.totalorder %s87, %s90
    %p96 = scmp.eq.s32.totalorder %s9, 0
    %p97 = por %p95, %p96
    %p98 = scmp.ne.s32.totalorder %s87, %s90
    %p99 = scmp.eq.s32.totalorder %s14, 15
    %p100 = por %p98, %p99
    %p101 = scmp.ne.s32.totalorder %s90, %s91
    %p102 = scmp.eq.s32.totalorder %s14, 0
    %p103 = por %p101, %p102
    %p104 = scmp.ne.s32.totalorder %s90, %s91
    %p105 = scmp.eq.s32.totalorder %s15, 15
    %p106 = por %p104, %p105
    %p108 = scmp.ne.s32.totalorder %s91, %s107
    %p109 = scmp.eq.s32.totalorder %s15, 0
    %p110 = por %p108, %p109
    %p111 = scmp.le.s32.totalorder 1, %s9
    %p112 = scmp.lt.s32.totalorder %s9, 17
    %p113 = pnand %p111, %p112
    %p114 = pneg %p113
    // Predicated region
    $region9: #{cnn_3d_forward.5} parent=5 // pred_check
      _
    $region10: #{cnn_3d_forward.5} parent=5 // pred_check_branch
      %116 = sbr.rel (%p113) target = $region12
    $region11: #{cnn_3d_forward.5} parent=5 // pred_region
      %s117 = ssub.s32 %s9, 1
      // Predicated region
      $region13: #{cnn_3d_forward.5} parent=11 // pred_check
        %p118 = pneg %p56
      $region14: #{cnn_3d_forward.5} parent=11 // pred_check_branch
        %120 = sbr.rel (%p118) target = $region16
      $region15: #{cnn_3d_forward.5} parent=11 // pred_region
        _
      $region16: #{cnn_3d_forward.5} parent=11 // pred_fallthru
        _
      // Predicated region
      $region17: #{cnn_3d_forward.5} parent=11 // pred_check
        %p121 = pneg %p77
      $region18: #{cnn_3d_forward.5} parent=11 // pred_check_branch
        %123 = sbr.rel (%p121) target = $region20
      $region19: #{cnn_3d_forward.5} parent=11 // pred_region
        _
      $region20: #{cnn_3d_forward.5} parent=11 // pred_fallthru
        _
    $region12: #{cnn_3d_forward.5} parent=5 // pred_fallthru
      _
    %p124 = scmp.lt.s32.totalorder %s9, 16
    // Predicated region
    $region21: #{cnn_3d_forward.5} parent=5 // pred_check
      %p125 = pneg %p124
    $region22: #{cnn_3d_forward.5} parent=5 // pred_check_branch
      %127 = sbr.rel (%p125) target = $region24
    $region23: #{cnn_3d_forward.5} parent=5 // pred_region
      // Predicated region
      $region25: #{cnn_3d_forward.5} parent=23 // pred_check
        %p128 = pneg %p29
      $region26: #{cnn_3d_forward.5} parent=23 // pred_check_branch
        %130 = sbr.rel (%p128) target = $region28
      $region27: #{cnn_3d_forward.5} parent=23 // pred_region
        %p131 = scmp.lt.s32.totalorder %s9, 15
        %s132 = scalar_select %p131, %s9, 15
        %s133 = smul.addr %s132, 2
        %s134 = smul.addr %s133, 8
        %s135 = scalar_lea.vmem %s0, %s134
      $region28: #{cnn_3d_forward.5} parent=23 // pred_fallthru
        _
    $region24: #{cnn_3d_forward.5} parent=5 // pred_fallthru
      _
    %p136 = scmp.le.s32.totalorder 1, %s9
    %p137 = scmp.lt.s32.totalorder %s9, 17
    %p138 = pnand %p136, %p137
    %p139 = pneg %p138
    // Predicated region
    $region29: #{cnn_3d_forward.5} parent=5 // pred_check
      _
    $region30: #{cnn_3d_forward.5} parent=5 // pred_check_branch
      %141 = sbr.rel (%p138) target = $region32
    $region31: #{cnn_3d_forward.5} parent=5 // pred_region
      %s142 = ssub.s32 %s9, 1
      %p143 = scmp.lt.s32.totalorder %s14, 15
      %s144 = scalar_select %p143, %s14, 15
      %s145 = smul.addr %s144, 2
      %s146 = smul.addr %s145, 8
      %s147 = scalar_lea.vmem %s0, %s146
      %p148 = pneg %p35
      %p149 = pneg %p32
      %p150 = pneg %p56
      %p151 = pneg %p53
      %p152 = pneg %p77
      %p153 = pneg %p74
      %p154 = pneg %p103
      %p155 = pneg %p100
      %p156 = scmp.lt.s32.totalorder %s14, 15
      %s157 = scalar_select %p156, %s14, 15
      %s158 = smul.addr %s157, 2
      %s159 = smul.addr %s158, 8
      %s160 = scalar_lea.vmem %s3, %s159
      %p161 = scmp.lt.s32.totalorder %s14, 15
      %s162 = scalar_select %p161, %s14, 15
      %s163 = smul.addr %s162, 2
      %s164 = smul.addr %s163, 8
      %s165 = scalar_lea.vmem %s0, %s164
      %p166 = scmp.lt.s32.totalorder %s14, 15
      %s167 = scalar_select %p166, %s14, 15
      %s168 = smul.addr %s167, 2
      %s169 = smul.addr %s168, 8
      %s170 = scalar_lea.vmem %s3, %s169
      %v171 = vld [vmem:[%s165] sm:$0xff]
      %v172 = vld [vmem:[%s165 + $0x8] sm:$0xff]
      %v173 = vld [vmem:[%s1] sm:$0x1]
      %v175 = vlaneseq
      %v176 = vshrl.u32 %v175, 7
      %v177 = vsub.s32 0, %v176
      %v178 = vrot.slane %v173, %v177
      %v180 = vmul.f32 %v171, %v178
      %v181 = vmul.f32 %v172, %v178
      %v182 = vld [vmem:[%s2] sm:$0x1]
      %v184 = vlaneseq
      %v185 = vshrl.u32 %v184, 7
      %v186 = vsub.s32 0, %v185
      %v187 = vrot.slane %v182, %v186
      %v189 = vadd.f32 %v180, %v187
      %v190 = vadd.f32 %v181, %v187
      %v191 = vmax.f32 %v189, 0.0
      %v192 = vmax.f32 %v190, 0.0
      %193 = vst [vmem:[%s170] sm:$0xff] %v191
      %194 = vst [vmem:[%s170 + $0x8] sm:$0xff] %v192
      %p195 = scmp.lt.s32.totalorder %s14, 15
      %s196 = scalar_select %p195, %s14, 15
      %s197 = smul.addr %s196, 2
      %s198 = smul.addr %s197, 8
      %s199 = scalar_lea.vmem %s3, %s198
      // Predicated region
      $region33: #{cnn_3d_forward.5} parent=31 // pred_check
        %p200 = pneg %p100
      $region34: #{cnn_3d_forward.5} parent=31 // pred_check_branch
        %202 = sbr.rel (%p200) target = $region36
      $region35: #{cnn_3d_forward.5} parent=31 // pred_region
        _
      $region36: #{cnn_3d_forward.5} parent=31 // pred_fallthru
        _
    $region32: #{cnn_3d_forward.5} parent=5 // pred_fallthru
      _
    %p203 = scmp.le.s32.totalorder 2, %s9
    // Predicated region
    $region37: #{cnn_3d_forward.5} parent=5 // pred_check
      %p204 = pneg %p203
    $region38: #{cnn_3d_forward.5} parent=5 // pred_check_branch
      %206 = sbr.rel (%p204) target = $region40
    $region39: #{cnn_3d_forward.5} parent=5 // pred_region
      %s207 = ssub.s32 %s9, 2
      // Predicated region
      $region41: #{cnn_3d_forward.5} parent=39 // pred_check
        %p208 = pneg %p106
      $region42: #{cnn_3d_forward.5} parent=39 // pred_check_branch
        %210 = sbr.rel (%p208) target = $region44
      $region43: #{cnn_3d_forward.5} parent=39 // pred_region
        %p211 = scmp.lt.s32.totalorder %s15, 15
        %s212 = scalar_select %p211, %s15, 15
        %s213 = smul.addr %s212, 2
        %s214 = smul.addr %s213, 8
        %s215 = scalar_lea.vmem %s3, %s214
      $region44: #{cnn_3d_forward.5} parent=39 // pred_fallthru
        _
    $region40: #{cnn_3d_forward.5} parent=5 // pred_fallthru
      _
  $region6: #{cnn_3d_forward.5} parent=0 // loop_footer
    %s13 = sadd.s32 1, %s9
  $region7: #{cnn_3d_forward.5} parent=0 // loop_footer_branch
    %8 = sbr.rel target = $region3
  $region8: #{cnn_3d_forward.5} parent=0 // loop_exit
    _

// kernel: cnn_3d_forward.6
$region0: #{cnn_3d_forward.6}
  #allocation0 [shape = 'u32[]', space=smem, size = 0x4, offset = 0x4, fixed_abs, tag = 'smem constant byte address 0x4 - core index']
  #allocation1 [shape = 'u32[144,128]{1,0:T(1,128)}', space=vmem, size = 0x12000, scoped, tag = 'internal scratch']
  %s0 = inlined_call_operand.vmem [shape: bf16[2,12,64,800], index: 0, kind: input, shape index: {}]
  %s1 = inlined_call_operand.vmem [shape: bf16[5,800,32], index: 1, kind: input, shape index: {}]
  %s2 = inlined_call_operand.vmem [shape: f32[2,8,64,32], index: 2, kind: output, shape index: {0}]
  %s3 = inlined_call_operand.vmem [shape: f32[2,8,1,32], index: 3, kind: output, shape index: {1}]
  %s4 = inlined_call_operand.vmem [shape: f32[2,8,1,32], index: 4, kind: output, shape index: {2}]
  %5 = xla_tuple %s2, %s3, %s4
  %s6 = sld [smem:[#allocation0]]
  $region65: #{cnn_3d_forward.6} parent=0
    _
  %s8 = ssub.s32 1, %s6
  %s9 = scalar_select 0, %s8, %s6
  loop: start=0, step=1, limit=82
  $region2: #{cnn_3d_forward.6} parent=0 // loop_pre_header
    _
  $region3: #{cnn_3d_forward.6} parent=0 // loop_header
    %s11 = sphi 0, %s15
    %p12 = scmp.ge.s32.totalorder %s11, 82
    %s18 = sphi 0, %s37
    %s19 = sphi 0, %s33
    %s20 = sphi 0, %s29
    %s21 = sphi 0, %s18
    %s22 = sphi 0, %s19
    %s23 = sphi 0, %s20
    %s24 = sphi 0, %s21
    %s25 = sphi 0, %s22
    %s26 = sphi 0, %s23
    %s44 = sphi 0, %s46
    %s47 = sphi 0, %s44
    %s48 = sphi 0, %s47
    %s64 = sphi 0, %s48
    %s70 = sphi 0, %s72
    %s73 = sphi 0, %s70
    %s74 = sphi 0, %s73
    %s90 = sphi 0, %s74
    %s98 = sphi 0, %s100
    %s101 = sphi 0, %s98
    %s102 = sphi 0, %s101
    %s118 = sphi 0, %s102
    %s126 = sphi 0, %s128
    %s129 = sphi 0, %s126
    %s130 = sphi 0, %s129
    %s146 = sphi 0, %s130
    %s154 = sphi 0, %s156
    %s157 = sphi 0, %s154
    %s158 = sphi 0, %s157
    %s174 = sphi 0, %s158
  $region4: #{cnn_3d_forward.6} parent=0 // loop_header_branch
    %14 = sbr.rel (%p12) target = $region8
  $region5: #{cnn_3d_forward.6} parent=0 // loop_body
    %s16 = ssub.s32 %s11, 1
    %s17 = ssub.s32 %s11, 2
    %s27 = sadd.s32 1, %s20
    %p28 = scmp.ge.s32.totalorder %s27, 5
    %s29 = scalar_select %p28, 0, %s27
    %s30 = sadd.s32 1, %s19
    %s31 = scalar_select %p28, %s30, %s19
    %p32 = scmp.ge.s32.totalorder %s31, 8
    %s33 = scalar_select %p32, 0, %s31
    %s34 = sadd.s32 1, %s18
    %s35 = scalar_select %p32, %s34, %s18
    %p36 = scmp.ge.s32.totalorder %s35, 2
    %s37 = scalar_select %p36, 0, %s35
    %s38 = sadd.s32 %s19, %s20
    %s39 = sadd.s32 %s33, %s29
    %s40 = ssub.s32 %s18, %s37
    %s41 = ssub.s32 %s38, %s39
    %s42 = sor.u32 %s40, %s41
    %p43 = scmp.eq.s32.totalorder %s42, 0
    %s45 = sadd.s32 %s44, 1
    %s46 = scalar_select %p43, %s44, %s45
    %p49 = pneg %p43
    %p50 = scmp.eq.s32.totalorder %s11, 79
    %p51 = por %p49, %p50
    %p52 = scmp.ne.s32.totalorder %s44, %s47
    %p53 = scmp.eq.s32.totalorder %s11, 0
    %p54 = por %p52, %p53
    %p55 = scmp.ne.s32.totalorder %s44, %s47
    %p56 = scmp.eq.s32.totalorder %s16, 79
    %p57 = por %p55, %p56
    %p58 = scmp.ne.s32.totalorder %s47, %s48
    %p59 = scmp.eq.s32.totalorder %s16, 0
    %p60 = por %p58, %p59
    %p61 = scmp.ne.s32.totalorder %s47, %s48
    %p62 = scmp.eq.s32.totalorder %s17, 79
    %p63 = por %p61, %p62
    %p65 = scmp.ne.s32.totalorder %s48, %s64
    %p66 = scmp.eq.s32.totalorder %s17, 0
    %p67 = por %p65, %p66
    %s68 = ssub.s32 %s20, %s29
    %p69 = scmp.eq.s32.totalorder %s68, 0
    %s71 = sadd.s32 %s70, 1
    %s72 = scalar_select %p69, %s70, %s71
    %p75 = pneg %p69
    %p76 = scmp.eq.s32.totalorder %s11, 79
    %p77 = por %p75, %p76
    %p78 = scmp.ne.s32.totalorder %s70, %s73
    %p79 = scmp.eq.s32.totalorder %s11, 0
    %p80 = por %p78, %p79
    %p81 = scmp.ne.s32.totalorder %s70, %s73
    %p82 = scmp.eq.s32.totalorder %s16, 79
    %p83 = por %p81, %p82
    %p84 = scmp.ne.s32.totalorder %s73, %s74
    %p85 = scmp.eq.s32.totalorder %s16, 0
    %p86 = por %p84, %p85
    %p87 = scmp.ne.s32.totalorder %s73, %s74
    %p88 = scmp.eq.s32.totalorder %s17, 79
    %p89 = por %p87, %p88
    %p91 = scmp.ne.s32.totalorder %s74, %s90
    %p92 = scmp.eq.s32.totalorder %s17, 0
    %p93 = por %p91, %p92
    %s94 = ssub.s32 %s18, %s37
    %s95 = ssub.s32 %s19, %s33
    %s96 = sor.u32 %s94, %s95
    %p97 = scmp.eq.s32.totalorder %s96, 0
    %s99 = sadd.s32 %s98, 1
    %s100 = scalar_select %p97, %s98, %s99
    %p103 = pneg %p97
    %p104 = scmp.eq.s32.totalorder %s11, 79
    %p105 = por %p103, %p104
    %p106 = scmp.ne.s32.totalorder %s98, %s101
    %p107 = scmp.eq.s32.totalorder %s11, 0
    %p108 = por %p106, %p107
    %p109 = scmp.ne.s32.totalorder %s98, %s101
    %p110 = scmp.eq.s32.totalorder %s16, 79
    %p111 = por %p109, %p110
    %p112 = scmp.ne.s32.totalorder %s101, %s102
    %p113 = scmp.eq.s32.totalorder %s16, 0
    %p114 = por %p112, %p113
    %p115 = scmp.ne.s32.totalorder %s101, %s102
    %p116 = scmp.eq.s32.totalorder %s17, 79
    %p117 = por %p115, %p116
    %p119 = scmp.ne.s32.totalorder %s102, %s118
    %p120 = scmp.eq.s32.totalorder %s17, 0
    %p121 = por %p119, %p120
    %s122 = ssub.s32 %s18, %s37
    %s123 = ssub.s32 %s19, %s33
    %s124 = sor.u32 %s122, %s123
    %p125 = scmp.eq.s32.totalorder %s124, 0
    %s127 = sadd.s32 %s126, 1
    %s128 = scalar_select %p125, %s126, %s127
    %p131 = pneg %p125
    %p132 = scmp.eq.s32.totalorder %s11, 79
    %p133 = por %p131, %p132
    %p134 = scmp.ne.s32.totalorder %s126, %s129
    %p135 = scmp.eq.s32.totalorder %s11, 0
    %p136 = por %p134, %p135
    %p137 = scmp.ne.s32.totalorder %s126, %s129
    %p138 = scmp.eq.s32.totalorder %s16, 79
    %p139 = por %p137, %p138
    %p140 = scmp.ne.s32.totalorder %s129, %s130
    %p141 = scmp.eq.s32.totalorder %s16, 0
    %p142 = por %p140, %p141
    %p143 = scmp.ne.s32.totalorder %s129, %s130
    %p144 = scmp.eq.s32.totalorder %s17, 79
    %p145 = por %p143, %p144
    %p147 = scmp.ne.s32.totalorder %s130, %s146
    %p148 = scmp.eq.s32.totalorder %s17, 0
    %p149 = por %p147, %p148
    %s150 = ssub.s32 %s18, %s37
    %s151 = ssub.s32 %s19, %s33
    %s152 = sor.u32 %s150, %s151
    %p153 = scmp.eq.s32.totalorder %s152, 0
    %s155 = sadd.s32 %s154, 1
    %s156 = scalar_select %p153, %s154, %s155
    %p159 = pneg %p153
    %p160 = scmp.eq.s32.totalorder %s11, 79
    %p161 = por %p159, %p160
    %p162 = scmp.ne.s32.totalorder %s154, %s157
    %p163 = scmp.eq.s32.totalorder %s11, 0
    %p164 = por %p162, %p163
    %p165 = scmp.ne.s32.totalorder %s154, %s157
    %p166 = scmp.eq.s32.totalorder %s16, 79
    %p167 = por %p165, %p166
    %p168 = scmp.ne.s32.totalorder %s157, %s158
    %p169 = scmp.eq.s32.totalorder %s16, 0
    %p170 = por %p168, %p169
    %p171 = scmp.ne.s32.totalorder %s157, %s158
    %p172 = scmp.eq.s32.totalorder %s17, 79
    %p173 = por %p171, %p172
    %p175 = scmp.ne.s32.totalorder %s158, %s174
    %p176 = scmp.eq.s32.totalorder %s17, 0
    %p177 = por %p175, %p176
    %p178 = scmp.le.s32.totalorder 1, %s11
    %p179 = scmp.lt.s32.totalorder %s11, 81
    %p180 = pnand %p178, %p179
    %p181 = pneg %p180
    // Predicated region
    $region9: #{cnn_3d_forward.6} parent=5 // pred_check
      _
    $region10: #{cnn_3d_forward.6} parent=5 // pred_check_branch
      %183 = sbr.rel (%p180) target = $region12
    $region11: #{cnn_3d_forward.6} parent=5 // pred_region
      %s184 = ssub.s32 %s11, 1
    $region12: #{cnn_3d_forward.6} parent=5 // pred_fallthru
      _
    %p185 = scmp.lt.s32.totalorder %s11, 80
    // Predicated region
    $region13: #{cnn_3d_forward.6} parent=5 // pred_check
      %p186 = pneg %p185
    $region14: #{cnn_3d_forward.6} parent=5 // pred_check_branch
      %188 = sbr.rel (%p186) target = $region16
    $region15: #{cnn_3d_forward.6} parent=5 // pred_region
      // Predicated region
      $region17: #{cnn_3d_forward.6} parent=15 // pred_check
        %p189 = pneg %p54
      $region18: #{cnn_3d_forward.6} parent=15 // pred_check_branch
        %191 = sbr.rel (%p189) target = $region20
      $region19: #{cnn_3d_forward.6} parent=15 // pred_region
        %s192 = sadd.s32 %s19, %s20
        %p193 = scmp.lt.s32.totalorder %s18, 1
        %s194 = scalar_select %p193, %s18, 1
        %p195 = scmp.lt.s32.totalorder %s192, 11
        %s196 = scalar_select %p195, %s192, 11
        %s197 = smul.addr %s196, 56
        %s198 = smul.addr %s194, 672
        %s199 = sadd.s32 %s197, %s198
        %s200 = smul.addr %s199, 4
        %s201 = scalar_lea.vmem %s0, %s200
        %s202 = sadd.s32 %s19, %s20
      $region20: #{cnn_3d_forward.6} parent=15 // pred_fallthru
        _
      // Predicated region
      $region21: #{cnn_3d_forward.6} parent=15 // pred_check
        %p203 = pneg %p80
      $region22: #{cnn_3d_forward.6} parent=15 // pred_check_branch
        %205 = sbr.rel (%p203) target = $region24
      $region23: #{cnn_3d_forward.6} parent=15 // pred_region
        %p206 = scmp.lt.s32.totalorder %s20, 4
        %s207 = scalar_select %p206, %s20, 4
        %s208 = smul.addr %s207, 100
        %s209 = smul.addr %s208, 4
        %s210 = scalar_lea.vmem %s1, %s209
      $region24: #{cnn_3d_forward.6} parent=15 // pred_fallthru
        _
    $region16: #{cnn_3d_forward.6} parent=5 // pred_fallthru
      _
    %p211 = scmp.le.s32.totalorder 1, %s11
    %p212 = scmp.lt.s32.totalorder %s11, 81
    %p213 = pnand %p211, %p212
    %p214 = pneg %p213
    // Predicated region
    $region25: #{cnn_3d_forward.6} parent=5 // pred_check
      _
    $region26: #{cnn_3d_forward.6} parent=5 // pred_check_branch
      %216 = sbr.rel (%p213) target = $region28
    $region27: #{cnn_3d_forward.6} parent=5 // pred_region
      %s217 = ssub.s32 %s11, 1
      %s218 = sadd.s32 %s22, %s23
      %p219 = scmp.lt.s32.totalorder %s21, 1
      %s220 = scalar_select %p219, %s21, 1
      %p221 = scmp.lt.s32.totalorder %s218, 11
      %s222 = scalar_select %p221, %s218, 11
      %s223 = smul.addr %s222, 56
      %s224 = smul.addr %s220, 672
      %s225 = sadd.s32 %s223, %s224
      %s226 = smul.addr %s225, 4
      %s227 = scalar_lea.vmem %s0, %s226
      %p228 = pneg %p60
      %p229 = pneg %p57
      %p230 = scmp.lt.s32.totalorder %s23, 4
      %s231 = scalar_select %p230, %s23, 4
      %s232 = smul.addr %s231, 100
      %s233 = smul.addr %s232, 4
      %s234 = scalar_lea.vmem %s1, %s233
      %p235 = pneg %p86
      %p236 = pneg %p83
      %p237 = pneg %p114
      %p238 = pneg %p111
      %p239 = scmp.lt.s32.totalorder %s21, 1
      %s240 = scalar_select %p239, %s21, 1
      %p241 = scmp.lt.s32.totalorder %s22, 7
      %s242 = scalar_select %p241, %s22, 7
      %s243 = smul.addr %s242, 8
      %s244 = smul.addr %s240, 64
      %s245 = sadd.s32 %s243, %s244
      %s246 = smul.addr %s245, 8
      %s247 = scalar_lea.vmem %s2, %s246
      %p248 = pneg %p142
      %p249 = pneg %p139
      %p250 = scmp.lt.s32.totalorder %s21, 1
      %s251 = scalar_select %p250, %s21, 1
      %p252 = scmp.lt.s32.totalorder %s22, 7
      %s253 = scalar_select %p252, %s22, 7
      %s254 = smul.addr %s251, 8
      %s255 = sadd.s32 %s253, %s254
      %s256 = scalar_lea.vmem %s3, %s255
      %p257 = pneg %p170
      %p258 = pneg %p167
      %p259 = scmp.lt.s32.totalorder %s21, 1
      %s260 = scalar_select %p259, %s21, 1
      %p261 = scmp.lt.s32.totalorder %s22, 7
      %s262 = scalar_select %p261, %s22, 7
      %s263 = smul.addr %s260, 8
      %s264 = sadd.s32 %s262, %s263
      %s265 = scalar_lea.vmem %s4, %s264
      %s266 = sadd.s32 %s22, %s23
      %p267 = scmp.lt.s32.totalorder %s21, 1
      %s268 = scalar_select %p267, %s21, 1
      %p269 = scmp.lt.s32.totalorder %s266, 11
      %s270 = scalar_select %p269, %s266, 11
      %s271 = smul.addr %s270, 56
      %s272 = smul.addr %s268, 672
      %s273 = sadd.s32 %s271, %s272
      %s274 = smul.addr %s273, 4
      %s275 = scalar_lea.vmem %s0, %s274
      %s276 = sadd.s32 %s22, %s23
      %p277 = scmp.lt.s32.totalorder %s23, 4
      %s278 = scalar_select %p277, %s23, 4
      %s279 = smul.addr %s278, 100
      %s280 = smul.addr %s279, 4
      %s281 = scalar_lea.vmem %s1, %s280
      %p282 = scmp.lt.s32.totalorder %s21, 1
      %s283 = scalar_select %p282, %s21, 1
      %p284 = scmp.lt.s32.totalorder %s22, 7
      %s285 = scalar_select %p284, %s22, 7
      %s286 = smul.addr %s285, 8
      %s287 = smul.addr %s283, 64
      %s288 = sadd.s32 %s286, %s287
      %s289 = smul.addr %s288, 8
      %s290 = scalar_lea.vmem %s2, %s289
      %p291 = scmp.lt.s32.totalorder %s21, 1
      %s292 = scalar_select %p291, %s21, 1
      %p293 = scmp.lt.s32.totalorder %s22, 7
      %s294 = scalar_select %p293, %s22, 7
      %s295 = smul.addr %s292, 8
      %s296 = sadd.s32 %s294, %s295
      %s297 = scalar_lea.vmem %s3, %s296
      %p298 = scmp.lt.s32.totalorder %s21, 1
      %s299 = scalar_select %p298, %s21, 1
      %p300 = scmp.lt.s32.totalorder %s22, 7
      %s301 = scalar_select %p300, %s22, 7
      %s302 = smul.addr %s299, 8
      %s303 = sadd.s32 %s301, %s302
      %s304 = scalar_lea.vmem %s4, %s303
      %p306 = scmp.eq.s32.totalorder %s23, 0
      // Predicated region
      $region29: #{cnn_3d_forward.6} parent=27 // pred_check
        %p307 = pneg %p306
      $region30: #{cnn_3d_forward.6} parent=27 // pred_check_branch
        %309 = sbr.rel (%p307) target = $region32
      $region31: #{cnn_3d_forward.6} parent=27 // pred_region
        %vm310 = vcmask 261120
        %311 = vst.msk [vmem:[%s290] sm:$0xff] %vm310, 0.0
        %312 = vst.msk [vmem:[%s290 + $0x8] sm:$0xff] %vm310, 0.0
        %313 = vst.msk [vmem:[%s290 + $0x10] sm:$0xff] %vm310, 0.0
        %314 = vst.msk [vmem:[%s290 + $0x18] sm:$0xff] %vm310, 0.0
        %315 = vst.msk [vmem:[%s290 + $0x20] sm:$0xff] %vm310, 0.0
        %316 = vst.msk [vmem:[%s290 + $0x28] sm:$0xff] %vm310, 0.0
        %317 = vst.msk [vmem:[%s290 + $0x30] sm:$0xff] %vm310, 0.0
        %318 = vst.msk [vmem:[%s290 + $0x38] sm:$0xff] %vm310, 0.0
      $region32: #{cnn_3d_forward.6} parent=27 // pred_fallthru
        _
      %v319 = vld [vmem:[%s290] sm:$0xff]
      %v320 = vld [vmem:[%s290 + $0x8] sm:$0xff]
      %v321 = vld [vmem:[%s290 + $0x10] sm:$0xff]
      %v322 = vld [vmem:[%s290 + $0x18] sm:$0xff]
      %v323 = vld [vmem:[%s290 + $0x20] sm:$0xff]
      %v324 = vld [vmem:[%s290 + $0x28] sm:$0xff]
      %v325 = vld [vmem:[%s290 + $0x30] sm:$0xff]
      %v326 = vld [vmem:[%s290 + $0x38] sm:$0xff]
      %v327 = vld [vmem:[%s275] sm:$0xff]
      %v328 = vld [vmem:[%s275 + $0x8] sm:$0xff]
      %v329 = vld [vmem:[%s275 + $0x10] sm:$0xff]
      %v330 = vld [vmem:[%s275 + $0x18] sm:$0xf]
      %v331 = vld [vmem:[%s275 + $0x1c] sm:$0xff]
      %v332 = vld [vmem:[%s275 + $0x24] sm:$0xff]
      %v333 = vld [vmem:[%s275 + $0x2c] sm:$0xff]
      %v334 = vld [vmem:[%s275 + $0x34] sm:$0xf]
      %v335 = vld [vmem:[%s275 + $0x38] sm:$0xff]
      %v336 = vld [vmem:[%s275 + $0x40] sm:$0xff]
      %v337 = vld [vmem:[%s275 + $0x48] sm:$0xff]
      %v338 = vld [vmem:[%s275 + $0x50] sm:$0xf]
      %v339 = vld [vmem:[%s275 + $0x54] sm:$0xff]
      %v340 = vld [vmem:[%s275 + $0x5c] sm:$0xff]
      %v341 = vld [vmem:[%s275 + $0x64] sm:$0xff]
      %v342 = vld [vmem:[%s275 + $0x6c] sm:$0xf]
      %v343 = vld [vmem:[%s275 + $0x70] sm:$0xff]
      %v344 = vld [vmem:[%s275 + $0x78] sm:$0xff]
      %v345 = vld [vmem:[%s275 + $0x80] sm:$0xff]
      %v346 = vld [vmem:[%s275 + $0x88] sm:$0xf]
      %v347 = vld [vmem:[%s275 + $0x8c] sm:$0xff]
      %v348 = vld [vmem:[%s275 + $0x94] sm:$0xff]
      %v349 = vld [vmem:[%s275 + $0x9c] sm:$0xff]
      %v350 = vld [vmem:[%s275 + $0xa4] sm:$0xf]
      %v351 = vld [vmem:[%s275 + $0xa8] sm:$0xff]
      %v352 = vld [vmem:[%s275 + $0xb0] sm:$0xff]
      %v353 = vld [vmem:[%s275 + $0xb8] sm:$0xff]
      %v354 = vld [vmem:[%s275 + $0xc0] sm:$0xf]
      %v355 = vld [vmem:[%s275 + $0xc4] sm:$0xff]
      %v356 = vld [vmem:[%s275 + $0xcc] sm:$0xff]
      %v357 = vld [vmem:[%s275 + $0xd4] sm:$0xff]
      %v358 = vld [vmem:[%s275 + $0xdc] sm:$0xf]
      %v359 = vld [vmem:[%s281] sm:$0xf]
      %v360 = vld [vmem:[%s281 + $0x4] sm:$0xf]
      %v361 = vld [vmem:[%s281 + $0x8] sm:$0xf]
      %v362 = vld [vmem:[%s281 + $0xc] sm:$0xf]
      %v363 = vld [vmem:[%s281 + $0x10] sm:$0xf]
      %v364 = vld [vmem:[%s281 + $0x14] sm:$0xf]
      %v365 = vld [vmem:[%s281 + $0x18] sm:$0xf]
      %v366 = vld [vmem:[%s281 + $0x1c] sm:$0xf]
      %v367 = vld [vmem:[%s281 + $0x20] sm:$0xf]
      %v368 = vld [vmem:[%s281 + $0x24] sm:$0xf]
      %v369 = vld [vmem:[%s281 + $0x28] sm:$0xf]
      %v370 = vld [vmem:[%s281 + $0x2c] sm:$0xf]
      %v371 = vld [vmem:[%s281 + $0x30] sm:$0xf]
      %v372 = vld [vmem:[%s281 + $0x34] sm:$0xf]
      %v373 = vld [vmem:[%s281 + $0x38] sm:$0xf]
      %v374 = vld [vmem:[%s281 + $0x3c] sm:$0xf]
      %v375 = vld [vmem:[%s281 + $0x40] sm:$0xf]
      %v376 = vld [vmem:[%s281 + $0x44] sm:$0xf]
      %v377 = vld [vmem:[%s281 + $0x48] sm:$0xf]
      %v378 = vld [vmem:[%s281 + $0x4c] sm:$0xf]
      %v379 = vld [vmem:[%s281 + $0x50] sm:$0xf]
      %v380 = vld [vmem:[%s281 + $0x54] sm:$0xf]
      %v381 = vld [vmem:[%s281 + $0x58] sm:$0xf]
      %v382 = vld [vmem:[%s281 + $0x5c] sm:$0xf]
      %v383 = vld [vmem:[%s281 + $0x60] sm:$0xf]
      %v384 = vld [vmem:[%s281 + $0x64] sm:$0xf]
      %v385 = vld [vmem:[%s281 + $0x68] sm:$0xf]
      %v386 = vld [vmem:[%s281 + $0x6c] sm:$0xf]
      %v387 = vld [vmem:[%s281 + $0x70] sm:$0xf]
      %v388 = vld [vmem:[%s281 + $0x74] sm:$0xf]
      %v389 = vld [vmem:[%s281 + $0x78] sm:$0xf]
      %v390 = vld [vmem:[%s281 + $0x7c] sm:$0xf]
      %v391 = vld [vmem:[%s281 + $0x80] sm:$0xf]
      %v392 = vld [vmem:[%s281 + $0x84] sm:$0xf]
      %v393 = vld [vmem:[%s281 + $0x88] sm:$0xf]
      %v394 = vld [vmem:[%s281 + $0x8c] sm:$0xf]
      %v395 = vld [vmem:[%s281 + $0x90] sm:$0xf]
      %v396 = vld [vmem:[%s281 + $0x94] sm:$0xf]
      %v397 = vld [vmem:[%s281 + $0x98] sm:$0xf]
      %v398 = vld [vmem:[%s281 + $0x9c] sm:$0xf]
      %v399 = vld [vmem:[%s281 + $0xa0] sm:$0xf]
      %v400 = vld [vmem:[%s281 + $0xa4] sm:$0xf]
      %v401 = vld [vmem:[%s281 + $0xa8] sm:$0xf]
      %v402 = vld [vmem:[%s281 + $0xac] sm:$0xf]
      %v403 = vld [vmem:[%s281 + $0xb0] sm:$0xf]
      %v404 = vld [vmem:[%s281 + $0xb4] sm:$0xf]
      %v405 = vld [vmem:[%s281 + $0xb8] sm:$0xf]
      %v406 = vld [vmem:[%s281 + $0xbc] sm:$0xf]
      %v407 = vld [vmem:[%s281 + $0xc0] sm:$0xf]
      %v408 = vld [vmem:[%s281 + $0xc4] sm:$0xf]
      %v409 = vld [vmem:[%s281 + $0xc8] sm:$0xf]
      %v410 = vld [vmem:[%s281 + $0xcc] sm:$0xf]
      %v411 = vld [vmem:[%s281 + $0xd0] sm:$0xf]
      %v412 = vld [vmem:[%s281 + $0xd4] sm:$0xf]
      %v413 = vld [vmem:[%s281 + $0xd8] sm:$0xf]
      %v414 = vld [vmem:[%s281 + $0xdc] sm:$0xf]
      %v415 = vld [vmem:[%s281 + $0xe0] sm:$0xf]
      %v416 = vld [vmem:[%s281 + $0xe4] sm:$0xf]
      %v417 = vld [vmem:[%s281 + $0xe8] sm:$0xf]
      %v418 = vld [vmem:[%s281 + $0xec] sm:$0xf]
      %v419 = vld [vmem:[%s281 + $0xf0] sm:$0xf]
      %v420 = vld [vmem:[%s281 + $0xf4] sm:$0xf]
      %v421 = vld [vmem:[%s281 + $0xf8] sm:$0xf]
      %v422 = vld [vmem:[%s281 + $0xfc] sm:$0xf]
      %v423 = vld [vmem:[%s281 + $0x100] sm:$0xf]
      %v424 = vld [vmem:[%s281 + $0x104] sm:$0xf]
      %v425 = vld [vmem:[%s281 + $0x108] sm:$0xf]
      %v426 = vld [vmem:[%s281 + $0x10c] sm:$0xf]
      %v427 = vld [vmem:[%s281 + $0x110] sm:$0xf]
      %v428 = vld [vmem:[%s281 + $0x114] sm:$0xf]
      %v429 = vld [vmem:[%s281 + $0x118] sm:$0xf]
      %v430 = vld [vmem:[%s281 + $0x11c] sm:$0xf]
      %v431 = vld [vmem:[%s281 + $0x120] sm:$0xf]
      %v432 = vld [vmem:[%s281 + $0x124] sm:$0xf]
      %v433 = vld [vmem:[%s281 + $0x128] sm:$0xf]
      %v434 = vld [vmem:[%s281 + $0x12c] sm:$0xf]
      %v435 = vld [vmem:[%s281 + $0x130] sm:$0xf]
      %v436 = vld [vmem:[%s281 + $0x134] sm:$0xf]
      %v437 = vld [vmem:[%s281 + $0x138] sm:$0xf]
      %v438 = vld [vmem:[%s281 + $0x13c] sm:$0xf]
      %v439 = vld [vmem:[%s281 + $0x140] sm:$0xf]
      %v440 = vld [vmem:[%s281 + $0x144] sm:$0xf]
      %v441 = vld [vmem:[%s281 + $0x148] sm:$0xf]
      %v442 = vld [vmem:[%s281 + $0x14c] sm:$0xf]
      %v443 = vld [vmem:[%s281 + $0x150] sm:$0xf]
      %v444 = vld [vmem:[%s281 + $0x154] sm:$0xf]
      %v445 = vld [vmem:[%s281 + $0x158] sm:$0xf]
      %v446 = vld [vmem:[%s281 + $0x15c] sm:$0xf]
      %v447 = vld [vmem:[%s281 + $0x160] sm:$0xf]
      %v448 = vld [vmem:[%s281 + $0x164] sm:$0xf]
      %v449 = vld [vmem:[%s281 + $0x168] sm:$0xf]
      %v450 = vld [vmem:[%s281 + $0x16c] sm:$0xf]
      %v451 = vld [vmem:[%s281 + $0x170] sm:$0xf]
      %v452 = vld [vmem:[%s281 + $0x174] sm:$0xf]
      %v453 = vld [vmem:[%s281 + $0x178] sm:$0xf]
      %v454 = vld [vmem:[%s281 + $0x17c] sm:$0xf]
      %v455 = vld [vmem:[%s281 + $0x180] sm:$0xf]
      %v456 = vld [vmem:[%s281 + $0x184] sm:$0xf]
      %v457 = vld [vmem:[%s281 + $0x188] sm:$0xf]
      %v458 = vld [vmem:[%s281 + $0x18c] sm:$0xf]
      %v491 = vunpack.c.l.b16 %v327
      %v492 = vunpack.c.h.b16 %v327
      %v493 = vunpack.c.l.b16 %v328
      %v494 = vunpack.c.h.b16 %v328
      %v495 = vunpack.c.l.b16 %v329
      %v496 = vunpack.c.h.b16 %v329
      %v497 = vunpack.c.l.b16 %v330
      %v498 = vunpack.c.l.b16 %v331
      %v499 = vunpack.c.h.b16 %v331
      %v500 = vunpack.c.l.b16 %v332
      %v501 = vunpack.c.h.b16 %v332
      %v502 = vunpack.c.l.b16 %v333
      %v503 = vunpack.c.h.b16 %v333
      %v504 = vunpack.c.l.b16 %v334
      %v505 = vunpack.c.l.b16 %v335
      %v506 = vunpack.c.h.b16 %v335
      %v507 = vunpack.c.l.b16 %v336
      %v508 = vunpack.c.h.b16 %v336
      %v509 = vunpack.c.l.b16 %v337
      %v510 = vunpack.c.h.b16 %v337
      %v511 = vunpack.c.l.b16 %v338
      %v512 = vunpack.c.l.b16 %v339
      %v513 = vunpack.c.h.b16 %v339
      %v514 = vunpack.c.l.b16 %v340
      %v515 = vunpack.c.h.b16 %v340
      %v516 = vunpack.c.l.b16 %v341
      %v517 = vunpack.c.h.b16 %v341
      %v518 = vunpack.c.l.b16 %v342
      %v519 = vunpack.c.l.b16 %v343
      %v520 = vunpack.c.h.b16 %v343
      %v521 = vunpack.c.l.b16 %v344
      %v522 = vunpack.c.h.b16 %v344
      %v523 = vunpack.c.l.b16 %v345
      %v524 = vunpack.c.h.b16 %v345
      %v525 = vunpack.c.l.b16 %v346
      %v526 = vunpack.c.l.b16 %v347
      %v527 = vunpack.c.h.b16 %v347
      %v528 = vunpack.c.l.b16 %v348
      %v529 = vunpack.c.h.b16 %v348
      %v530 = vunpack.c.l.b16 %v349
      %v531 = vunpack.c.h.b16 %v349
      %v532 = vunpack.c.l.b16 %v350
      %v533 = vunpack.c.l.b16 %v351
      %v534 = vunpack.c.h.b16 %v351
      %v535 = vunpack.c.l.b16 %v352
      %v536 = vunpack.c.h.b16 %v352
      %v537 = vunpack.c.l.b16 %v353
      %v538 = vunpack.c.h.b16 %v353
      %v539 = vunpack.c.l.b16 %v354
      %v540 = vunpack.c.l.b16 %v355
      %v541 = vunpack.c.h.b16 %v355
      %v542 = vunpack.c.l.b16 %v356
      %v543 = vunpack.c.h.b16 %v356
      %v544 = vunpack.c.l.b16 %v357
      %v545 = vunpack.c.h.b16 %v357
      %v546 = vunpack.c.l.b16 %v358
      %v547 = vpack.c.b16 %v498, %v491
      %v548 = vpack.c.b16 %v499, %v492
      %v549 = vpack.c.b16 %v500, %v493
      %v550 = vpack.c.b16 %v501, %v494
      %v551 = vpack.c.b16 %v502, %v495
      %v552 = vpack.c.b16 %v503, %v496
      %v553 = vpack.c.b16 %v504, %v497
      %v554 = vpack.c.b16 %v512, %v505
      %v555 = vpack.c.b16 %v513, %v506
      %v556 = vpack.c.b16 %v514, %v507
      %v557 = vpack.c.b16 %v515, %v508
      %v558 = vpack.c.b16 %v516, %v509
      %v559 = vpack.c.b16 %v517, %v510
      %v560 = vpack.c.b16 %v518, %v511
      %v561 = vpack.c.b16 %v526, %v519
      %v562 = vpack.c.b16 %v527, %v520
      %v563 = vpack.c.b16 %v528, %v521
      %v564 = vpack.c.b16 %v529, %v522
      %v565 = vpack.c.b16 %v530, %v523
      %v566 = vpack.c.b16 %v531, %v524
      %v567 = vpack.c.b16 %v532, %v525
      %v568 = vpack.c.b16 %v540, %v533
      %v569 = vpack.c.b16 %v541, %v534
      %v570 = vpack.c.b16 %v542, %v535
      %v571 = vpack.c.b16 %v543, %v536
      %v572 = vpack.c.b16 %v544, %v537
      %v573 = vpack.c.b16 %v545, %v538
      %v574 = vpack.c.b16 %v546, %v539
      %v699 = vunpack.c.l.b16 %v359
      %v700 = vunpack.c.l.b16 %v360
      %v701 = vunpack.c.l.b16 %v361
      %v702 = vunpack.c.l.b16 %v362
      %v703 = vunpack.c.l.b16 %v363
      %v704 = vunpack.c.l.b16 %v364
      %v705 = vunpack.c.l.b16 %v365
      %v706 = vunpack.c.l.b16 %v366
      %v707 = vunpack.c.l.b16 %v367
      %v708 = vunpack.c.l.b16 %v368
      %v709 = vunpack.c.l.b16 %v369
      %v710 = vunpack.c.l.b16 %v370
      %v711 = vunpack.c.l.b16 %v371
      %v712 = vunpack.c.l.b16 %v372
      %v713 = vunpack.c.l.b16 %v373
      %v714 = vunpack.c.l.b16 %v374
      %v715 = vunpack.c.l.b16 %v375
      %v716 = vunpack.c.l.b16 %v376
      %v717 = vunpack.c.l.b16 %v377
      %v718 = vunpack.c.l.b16 %v378
      %v719 = vunpack.c.l.b16 %v379
      %v720 = vunpack.c.l.b16 %v380
      %v721 = vunpack.c.l.b16 %v381
      %v722 = vunpack.c.l.b16 %v382
      %v723 = vunpack.c.l.b16 %v383
      %v724 = vunpack.c.l.b16 %v384
      %v725 = vunpack.c.l.b16 %v385
      %v726 = vunpack.c.l.b16 %v386
      %v727 = vunpack.c.l.b16 %v387
      %v728 = vunpack.c.l.b16 %v388
      %v729 = vunpack.c.l.b16 %v389
      %v730 = vunpack.c.l.b16 %v390
      %v731 = vunpack.c.l.b16 %v391
      %v732 = vunpack.c.l.b16 %v392
      %v733 = vunpack.c.l.b16 %v393
      %v734 = vunpack.c.l.b16 %v394
      %v735 = vunpack.c.l.b16 %v395
      %v736 = vunpack.c.l.b16 %v396
      %v737 = vunpack.c.l.b16 %v397
      %v738 = vunpack.c.l.b16 %v398
      %v739 = vunpack.c.l.b16 %v399
      %v740 = vunpack.c.l.b16 %v400
      %v741 = vunpack.c.l.b16 %v401
      %v742 = vunpack.c.l.b16 %v402
      %v743 = vunpack.c.l.b16 %v403
      %v744 = vunpack.c.l.b16 %v404
      %v745 = vunpack.c.l.b16 %v405
      %v746 = vunpack.c.l.b16 %v406
      %v747 = vunpack.c.l.b16 %v407
      %v748 = vunpack.c.l.b16 %v408
      %v749 = vunpack.c.l.b16 %v409
      %v750 = vunpack.c.l.b16 %v410
      %v751 = vunpack.c.l.b16 %v411
      %v752 = vunpack.c.l.b16 %v412
      %v753 = vunpack.c.l.b16 %v413
      %v754 = vunpack.c.l.b16 %v414
      %v755 = vunpack.c.l.b16 %v415
      %v756 = vunpack.c.l.b16 %v416
      %v757 = vunpack.c.l.b16 %v417
      %v758 = vunpack.c.l.b16 %v418
      %v759 = vunpack.c.l.b16 %v419
      %v760 = vunpack.c.l.b16 %v420
      %v761 = vunpack.c.l.b16 %v421
      %v762 = vunpack.c.l.b16 %v422
      %v763 = vunpack.c.l.b16 %v423
      %v764 = vunpack.c.l.b16 %v424
      %v765 = vunpack.c.l.b16 %v425
      %v766 = vunpack.c.l.b16 %v426
      %v767 = vunpack.c.l.b16 %v427
      %v768 = vunpack.c.l.b16 %v428
      %v769 = vunpack.c.l.b16 %v429
      %v770 = vunpack.c.l.b16 %v430
      %v771 = vunpack.c.l.b16 %v431
      %v772 = vunpack.c.l.b16 %v432
      %v773 = vunpack.c.l.b16 %v433
      %v774 = vunpack.c.l.b16 %v434
      %v775 = vunpack.c.l.b16 %v435
      %v776 = vunpack.c.l.b16 %v436
      %v777 = vunpack.c.l.b16 %v437
      %v778 = vunpack.c.l.b16 %v438
      %v779 = vunpack.c.l.b16 %v439
      %v780 = vunpack.c.l.b16 %v440
      %v781 = vunpack.c.l.b16 %v441
      %v782 = vunpack.c.l.b16 %v442
      %v783 = vunpack.c.l.b16 %v443
      %v784 = vunpack.c.l.b16 %v444
      %v785 = vunpack.c.l.b16 %v445
      %v786 = vunpack.c.l.b16 %v446
      %v787 = vunpack.c.l.b16 %v447
      %v788 = vunpack.c.l.b16 %v448
      %v789 = vunpack.c.l.b16 %v449
      %v790 = vunpack.c.l.b16 %v450
      %v791 = vunpack.c.l.b16 %v451
      %v792 = vunpack.c.l.b16 %v452
      %v793 = vunpack.c.l.b16 %v453
      %v794 = vunpack.c.l.b16 %v454
      %v795 = vunpack.c.l.b16 %v455
      %v796 = vunpack.c.l.b16 %v456
      %v797 = vunpack.c.l.b16 %v457
      %v798 = vunpack.c.l.b16 %v458
      %v799 = vpack.c.b16 %v700, %v699
      %v800 = vpack.c.b16 %v702, %v701
      %v801 = vpack.c.b16 %v704, %v703
      %v802 = vpack.c.b16 %v706, %v705
      %v803 = vpack.c.b16 %v708, %v707
      %v804 = vpack.c.b16 %v710, %v709
      %v805 = vpack.c.b16 %v712, %v711
      %v806 = vpack.c.b16 %v714, %v713
      %v807 = vpack.c.b16 %v716, %v715
      %v808 = vpack.c.b16 %v718, %v717
      %v809 = vpack.c.b16 %v720, %v719
      %v810 = vpack.c.b16 %v722, %v721
      %v811 = vpack.c.b16 %v724, %v723
      %v812 = vpack.c.b16 %v726, %v725
      %v813 = vpack.c.b16 %v728, %v727
      %v814 = vpack.c.b16 %v730, %v729
      %v815 = vpack.c.b16 %v732, %v731
      %v816 = vpack.c.b16 %v734, %v733
      %v817 = vpack.c.b16 %v736, %v735
      %v818 = vpack.c.b16 %v738, %v737
      %v819 = vpack.c.b16 %v740, %v739
      %v820 = vpack.c.b16 %v742, %v741
      %v821 = vpack.c.b16 %v744, %v743
      %v822 = vpack.c.b16 %v746, %v745
      %v823 = vpack.c.b16 %v748, %v747
      %v824 = vpack.c.b16 %v750, %v749
      %v825 = vpack.c.b16 %v752, %v751
      %v826 = vpack.c.b16 %v754, %v753
      %v827 = vpack.c.b16 %v756, %v755
      %v828 = vpack.c.b16 %v758, %v757
      %v829 = vpack.c.b16 %v760, %v759
      %v830 = vpack.c.b16 %v762, %v761
      %v831 = vpack.c.b16 %v764, %v763
      %v832 = vpack.c.b16 %v766, %v765
      %v833 = vpack.c.b16 %v768, %v767
      %v834 = vpack.c.b16 %v770, %v769
      %v835 = vpack.c.b16 %v772, %v771
      %v836 = vpack.c.b16 %v774, %v773
      %v837 = vpack.c.b16 %v776, %v775
      %v838 = vpack.c.b16 %v778, %v777
      %v839 = vpack.c.b16 %v780, %v779
      %v840 = vpack.c.b16 %v782, %v781
      %v841 = vpack.c.b16 %v784, %v783
      %v842 = vpack.c.b16 %v786, %v785
      %v843 = vpack.c.b16 %v788, %v787
      %v844 = vpack.c.b16 %v790, %v789
      %v845 = vpack.c.b16 %v792, %v791
      %v846 = vpack.c.b16 %v794, %v793
      %v847 = vpack.c.b16 %v796, %v795
      %v848 = vpack.c.b16 %v798, %v797
      %vm899 = vcmask 261120
      %v901 = vsel %vm899, %v553, 0
      %v904 = vsel %vm899, %v560, 0
      %v907 = vsel %vm899, %v567, 0
      %v910 = vsel %vm899, %v574, 0
      %912 = vmatprep.subr.bf16.mxu0 0
      %913 = vmatpush1.bf16.msra.mxu0 %v799
      %914 = vmatprep.subr.bf16.mxu0 0
      %915 = vmatpush1.bf16.msra.mxu0 %v800
      %916 = vmatprep.subr.bf16.mxu0 0
      %917 = vmatpush1.bf16.msra.mxu0 %v801
      %918 = vmatprep.subr.bf16.mxu0 0
      %919 = vmatpush1.bf16.msra.mxu0 %v802
      %920 = vmatprep.subr.bf16.mxu0 0
      %921 = vmatpush1.bf16.msra.mxu0 %v803
      %922 = vmatprep.subr.bf16.mxu0 0
      %923 = vmatpush1.bf16.msra.mxu0 %v804
      %924 = vmatprep.subr.bf16.mxu0 0
      %925 = vmatpush1.bf16.msra.mxu0 %v805
      %926 = vmatprep.subr.bf16.mxu0 0
      %927 = vmatpush1.bf16.msra.mxu0 %v806
      %928 = vmatprep.subr.bf16.mxu0 0
      %929 = vmatpush1.bf16.msra.mxu0 %v807
      %930 = vmatprep.subr.bf16.mxu0 0
      %931 = vmatpush1.bf16.msra.mxu0 %v808
      %932 = vmatprep.subr.bf16.mxu0 0
      %933 = vmatpush1.bf16.msra.mxu0 %v809
      %934 = vmatprep.subr.bf16.mxu0 0
      %935 = vmatpush1.bf16.msra.mxu0 %v810
      %936 = vmatprep.subr.bf16.mxu0 0
      %937 = vmatpush1.bf16.msra.mxu0 %v811
      %938 = vmatprep.subr.bf16.mxu0 0
      %939 = vmatpush1.bf16.msra.mxu0 %v812
      %940 = vmatprep.subr.bf16.mxu0 0
      %941 = vmatpush1.bf16.msra.mxu0 %v813
      %942 = vmatprep.subr.bf16.mxu0 0
      %943 = vmatpush1.bf16.msra.mxu0 %v814
      %944 = vmatprep.mubr.bf16.mxu0 %v548
      %945 = vmatmul.mubr.bf16.gmra.mrb[0].mxu0 %v547
      %v946 = vpop.f32.mrb[0].mxu0
      %v947 = vadd.f32 0.0, %v946
      %v948 = vpop.f32.mrb[0].mxu0
      %v949 = vpop.f32.mrb[0].mxu0
      %v950 = vadd.f32 0.0, %v949
      %v951 = vpop.f32.mrb[0].mxu0
      %952 = vmatprep.mubr.bf16.mxu0 %v555
      %953 = vmatmul.mubr.bf16.gmra.mrb[0].mxu0 %v554
      %v954 = vpop.f32.mrb[0].mxu0
      %v955 = vadd.f32 0.0, %v954
      %v956 = vpop.f32.mrb[0].mxu0
      %v957 = vpop.f32.mrb[0].mxu0
      %v958 = vadd.f32 0.0, %v957
      %v959 = vpop.f32.mrb[0].mxu0
      %960 = vmatprep.mubr.bf16.mxu0 %v562
      %961 = vmatmul.mubr.bf16.gmra.mrb[0].mxu0 %v561
      %v962 = vpop.f32.mrb[0].mxu0
      %v963 = vadd.f32 0.0, %v962
      %v964 = vpop.f32.mrb[0].mxu0
      %v965 = vpop.f32.mrb[0].mxu0
      %v966 = vadd.f32 0.0, %v965
      %v967 = vpop.f32.mrb[0].mxu0
      %968 = vmatprep.mubr.bf16.mxu0 %v569
      %969 = vmatmul.mubr.bf16.gmra.mrb[0].mxu0 %v568
      %v970 = vpop.f32.mrb[0].mxu0
      %v971 = vadd.f32 0.0, %v970
      %v972 = vpop.f32.mrb[0].mxu0
      %v973 = vpop.f32.mrb[0].mxu0
      %v974 = vadd.f32 0.0, %v973
      %v975 = vpop.f32.mrb[0].mxu0
      %976 = vdwg.mxu0
      %977 = vmatprep.subr.bf16.mxu0 0
      %978 = vmatpush1.bf16.msra.mxu0 %v815
      %979 = vmatprep.subr.bf16.mxu0 0
      %980 = vmatpush1.bf16.msra.mxu0 %v816
      %981 = vmatprep.subr.bf16.mxu0 0
      %982 = vmatpush1.bf16.msra.mxu0 %v817
      %983 = vmatprep.subr.bf16.mxu0 0
      %984 = vmatpush1.bf16.msra.mxu0 %v818
      %985 = vmatprep.subr.bf16.mxu0 0
      %986 = vmatpush1.bf16.msra.mxu0 %v819
      %987 = vmatprep.subr.bf16.mxu0 0
      %988 = vmatpush1.bf16.msra.mxu0 %v820
      %989 = vmatprep.subr.bf16.mxu0 0
      %990 = vmatpush1.bf16.msra.mxu0 %v821
      %991 = vmatprep.subr.bf16.mxu0 0
      %992 = vmatpush1.bf16.msra.mxu0 %v822
      %993 = vmatprep.subr.bf16.mxu0 0
      %994 = vmatpush1.bf16.msra.mxu0 %v823
      %995 = vmatprep.subr.bf16.mxu0 0
      %996 = vmatpush1.bf16.msra.mxu0 %v824
      %997 = vmatprep.subr.bf16.mxu0 0
      %998 = vmatpush1.bf16.msra.mxu0 %v825
      %999 = vmatprep.subr.bf16.mxu0 0
      %1000 = vmatpush1.bf16.msra.mxu0 %v826
      %1001 = vmatprep.subr.bf16.mxu0 0
      %1002 = vmatpush1.bf16.msra.mxu0 %v827
      %1003 = vmatprep.subr.bf16.mxu0 0
      %1004 = vmatpush1.bf16.msra.mxu0 %v828
      %1005 = vmatprep.subr.bf16.mxu0 0
      %1006 = vmatpush1.bf16.msra.mxu0 %v829
      %1007 = vmatprep.subr.bf16.mxu0 0
      %1008 = vmatpush1.bf16.msra.mxu0 %v830
      %1009 = vmatprep.mubr.bf16.mxu0 %v550
      %1010 = vmatmul.mubr.bf16.gmra.mrb[0].mxu0 %v549
      %v1011 = vpop.f32.mrb[0].mxu0
      %v1012 = vadd.f32 %v947, %v1011
      %v1013 = vpop.f32.mrb[0].mxu0
      %v1014 = vpop.f32.mrb[0].mxu0
      %v1015 = vadd.f32 %v950, %v1014
      %v1016 = vpop.f32.mrb[0].mxu0
      %1017 = vmatprep.mubr.bf16.mxu0 %v557
      %1018 = vmatmul.mubr.bf16.gmra.mrb[0].mxu0 %v556
      %v1019 = vpop.f32.mrb[0].mxu0
      %v1020 = vadd.f32 %v955, %v1019
      %v1021 = vpop.f32.mrb[0].mxu0
      %v1022 = vpop.f32.mrb[0].mxu0
      %v1023 = vadd.f32 %v958, %v1022
      %v1024 = vpop.f32.mrb[0].mxu0
      %1025 = vmatprep.mubr.bf16.mxu0 %v564
      %1026 = vmatmul.mubr.bf16.gmra.mrb[0].mxu0 %v563
      %v1027 = vpop.f32.mrb[0].mxu0
      %v1028 = vadd.f32 %v963, %v1027
      %v1029 = vpop.f32.mrb[0].mxu0
      %v1030 = vpop.f32.mrb[0].mxu0
      %v1031 = vadd.f32 %v966, %v1030
      %v1032 = vpop.f32.mrb[0].mxu0
      %1033 = vmatprep.mubr.bf16.mxu0 %v571
      %1034 = vmatmul.mubr.bf16.gmra.mrb[0].mxu0 %v570
      %v1035 = vpop.f32.mrb[0].mxu0
      %v1036 = vadd.f32 %v971, %v1035
      %v1037 = vpop.f32.mrb[0].mxu0
      %v1038 = vpop.f32.mrb[0].mxu0
      %v1039 = vadd.f32 %v974, %v1038
      %v1040 = vpop.f32.mrb[0].mxu0
      %1041 = vdwg.mxu0
      %1042 = vmatprep.subr.bf16.mxu0 0
      %1043 = vmatpush1.bf16.msra.mxu0 %v831
      %1044 = vmatprep.subr.bf16.mxu0 0
      %1045 = vmatpush1.bf16.msra.mxu0 %v832
      %1046 = vmatprep.subr.bf16.mxu0 0
      %1047 = vmatpush1.bf16.msra.mxu0 %v833
      %1048 = vmatprep.subr.bf16.mxu0 0
      %1049 = vmatpush1.bf16.msra.mxu0 %v834
      %1050 = vmatprep.subr.bf16.mxu0 0
      %1051 = vmatpush1.bf16.msra.mxu0 %v835
      %1052 = vmatprep.subr.bf16.mxu0 0
      %1053 = vmatpush1.bf16.msra.mxu0 %v836
      %1054 = vmatprep.subr.bf16.mxu0 0
      %1055 = vmatpush1.bf16.msra.mxu0 %v837
      %1056 = vmatprep.subr.bf16.mxu0 0
      %1057 = vmatpush1.bf16.msra.mxu0 %v838
      %1058 = vmatprep.subr.bf16.mxu0 0
      %1059 = vmatpush1.bf16.msra.mxu0 %v839
      %1060 = vmatprep.subr.bf16.mxu0 0
      %1061 = vmatpush1.bf16.msra.mxu0 %v840
      %1062 = vmatprep.subr.bf16.mxu0 0
      %1063 = vmatpush1.bf16.msra.mxu0 %v841
      %1064 = vmatprep.subr.bf16.mxu0 0
      %1065 = vmatpush1.bf16.msra.mxu0 %v842
      %1066 = vmatprep.subr.bf16.mxu0 0
      %1067 = vmatpush1.bf16.msra.mxu0 %v843
      %1068 = vmatprep.subr.bf16.mxu0 0
      %1069 = vmatpush1.bf16.msra.mxu0 %v844
      %1070 = vmatprep.subr.bf16.mxu0 0
      %1071 = vmatpush1.bf16.msra.mxu0 %v845
      %1072 = vmatprep.subr.bf16.mxu0 0
      %1073 = vmatpush1.bf16.msra.mxu0 %v846
      %1074 = vmatprep.mubr.bf16.mxu0 %v552
      %1075 = vmatmul.mubr.bf16.gmra.mrb[0].mxu0 %v551
      %v1076 = vpop.f32.mrb[0].mxu0
      %v1077 = vadd.f32 %v1012, %v1076
      %v1078 = vpop.f32.mrb[0].mxu0
      %v1079 = vpop.f32.mrb[0].mxu0
      %v1080 = vadd.f32 %v1015, %v1079
      %v1081 = vpop.f32.mrb[0].mxu0
      %1082 = vmatprep.mubr.bf16.mxu0 %v559
      %1083 = vmatmul.mubr.bf16.gmra.mrb[0].mxu0 %v558
      %v1084 = vpop.f32.mrb[0].mxu0
      %v1085 = vadd.f32 %v1020, %v1084
      %v1086 = vpop.f32.mrb[0].mxu0
      %v1087 = vpop.f32.mrb[0].mxu0
      %v1088 = vadd.f32 %v1023, %v1087
      %v1089 = vpop.f32.mrb[0].mxu0
      %1090 = vmatprep.mubr.bf16.mxu0 %v566
      %1091 = vmatmul.mubr.bf16.gmra.mrb[0].mxu0 %v565
      %v1092 = vpop.f32.mrb[0].mxu0
      %v1093 = vadd.f32 %v1028, %v1092
      %v1094 = vpop.f32.mrb[0].mxu0
      %v1095 = vpop.f32.mrb[0].mxu0
      %v1096 = vadd.f32 %v1031, %v1095
      %v1097 = vpop.f32.mrb[0].mxu0
      %1098 = vmatprep.mubr.bf16.mxu0 %v573
      %1099 = vmatmul.mubr.bf16.gmra.mrb[0].mxu0 %v572
      %v1100 = vpop.f32.mrb[0].mxu0
      %v1101 = vadd.f32 %v1036, %v1100
      %v1102 = vpop.f32.mrb[0].mxu0
      %v1103 = vpop.f32.mrb[0].mxu0
      %v1104 = vadd.f32 %v1039, %v1103
      %v1105 = vpop.f32.mrb[0].mxu0
      %1106 = vdwg.mxu0
      %1107 = vmatprep.subr.bf16.mxu0 0
      %1108 = vmatpush1.bf16.msra.mxu0 %v847
      %1109 = vmatprep.subr.bf16.mxu0 0
      %1110 = vmatpush1.bf16.msra.mxu0 %v848
      %1111 = vmatprep.subr.bf16.mxu0 0
      %1112 = vmatpush1.bf16.msra.mxu0 0
      %1113 = vmatprep.subr.bf16.mxu0 0
      %1114 = vmatpush1.bf16.msra.mxu0 0
      %1115 = vmatprep.subr.bf16.mxu0 0
      %1116 = vmatpush1.bf16.msra.mxu0 0
      %1117 = vmatprep.subr.bf16.mxu0 0
      %1118 = vmatpush1.bf16.msra.mxu0 0
      %1119 = vmatprep.subr.bf16.mxu0 0
      %1120 = vmatpush1.bf16.msra.mxu0 0
      %1121 = vmatprep.subr.bf16.mxu0 0
      %1122 = vmatpush1.bf16.msra.mxu0 0
      %1123 = vmatprep.subr.bf16.mxu0 0
      %1124 = vmatpush1.bf16.msra.mxu0 0
      %1125 = vmatprep.subr.bf16.mxu0 0
      %1126 = vmatpush1.bf16.msra.mxu0 0
      %1127 = vmatprep.subr.bf16.mxu0 0
      %1128 = vmatpush1.bf16.msra.mxu0 0
      %1129 = vmatprep.subr.bf16.mxu0 0
      %1130 = vmatpush1.bf16.msra.mxu0 0
      %1131 = vmatprep.subr.bf16.mxu0 0
      %1132 = vmatpush1.bf16.msra.mxu0 0
      %1133 = vmatprep.subr.bf16.mxu0 0
      %1134 = vmatpush1.bf16.msra.mxu0 0
      %1135 = vmatprep.subr.bf16.mxu0 0
      %1136 = vmatpush1.bf16.msra.mxu0 0
      %1137 = vmatprep.subr.bf16.mxu0 0
      %1138 = vmatpush1.bf16.msra.mxu0 0
      %1139 = vmatprep.mubr.bf16.mxu0 0
      %1140 = vmatmul.mubr.bf16.gmra.mrb[0].mxu0 %v901
      %v1141 = vpop.f32.mrb[0].mxu0
      %v1142 = vadd.f32 %v1077, %v1141
      %v1143 = vpop.f32.mrb[0].mxu0
      %v1144 = vpop.f32.mrb[0].mxu0
      %v1145 = vadd.f32 %v1080, %v1144
      %v1146 = vpop.f32.mrb[0].mxu0
      %1147 = vmatprep.mubr.bf16.mxu0 0
      %1148 = vmatmul.mubr.bf16.gmra.mrb[0].mxu0 %v904
      %v1149 = vpop.f32.mrb[0].mxu0
      %v1150 = vadd.f32 %v1085, %v1149
      %v1151 = vpop.f32.mrb[0].mxu0
      %v1152 = vpop.f32.mrb[0].mxu0
      %v1153 = vadd.f32 %v1088, %v1152
      %v1154 = vpop.f32.mrb[0].mxu0
      %1155 = vmatprep.mubr.bf16.mxu0 0
      %1156 = vmatmul.mubr.bf16.gmra.mrb[0].mxu0 %v907
      %v1157 = vpop.f32.mrb[0].mxu0
      %v1158 = vadd.f32 %v1093, %v1157
      %v1159 = vpop.f32.mrb[0].mxu0
      %v1160 = vpop.f32.mrb[0].mxu0
      %v1161 = vadd.f32 %v1096, %v1160
      %v1162 = vpop.f32.mrb[0].mxu0
      %1163 = vmatprep.mubr.bf16.mxu0 0
      %1164 = vmatmul.mubr.bf16.gmra.mrb[0].mxu0 %v910
      %v1165 = vpop.f32.mrb[0].mxu0
      %v1166 = vadd.f32 %v1101, %v1165
      %v1167 = vpop.f32.mrb[0].mxu0
      %v1168 = vpop.f32.mrb[0].mxu0
      %v1169 = vadd.f32 %v1104, %v1168
      %v1170 = vpop.f32.mrb[0].mxu0
      %1171 = vdwg.mxu0
      %v1172 = vadd.f32 %v319, %v1142
      %v1173 = vadd.f32 %v320, %v1145
      %v1174 = vadd.f32 %v321, %v1150
      %v1175 = vadd.f32 %v322, %v1153
      %v1176 = vadd.f32 %v323, %v1158
      %v1177 = vadd.f32 %v324, %v1161
      %v1178 = vadd.f32 %v325, %v1166
      %v1179 = vadd.f32 %v326, %v1169
      %1180 = vst.msk [vmem:[%s290] sm:$0xff] %vm899, %v1172
      %1181 = vst.msk [vmem:[%s290 + $0x8] sm:$0xff] %vm899, %v1173
      %1182 = vst.msk [vmem:[%s290 + $0x10] sm:$0xff] %vm899, %v1174
      %1183 = vst.msk [vmem:[%s290 + $0x18] sm:$0xff] %vm899, %v1175
      %1184 = vst.msk [vmem:[%s290 + $0x20] sm:$0xff] %vm899, %v1176
      %1185 = vst.msk [vmem:[%s290 + $0x28] sm:$0xff] %vm899, %v1177
      %1186 = vst.msk [vmem:[%s290 + $0x30] sm:$0xff] %vm899, %v1178
      %1187 = vst.msk [vmem:[%s290 + $0x38] sm:$0xff] %vm899, %v1179
      %p1188 = scmp.eq.s32.totalorder %s23, 4
      // Predicated region
      $region33: #{cnn_3d_forward.6} parent=27 // pred_check
        %p1189 = pneg %p1188
      $region34: #{cnn_3d_forward.6} parent=27 // pred_check_branch
        %1191 = sbr.rel (%p1189) target = $region36
      $region35: #{cnn_3d_forward.6} parent=27 // pred_region
        %v1192 = vld [vmem:[%s290] sm:$0xff]
        %v1193 = vld [vmem:[%s290 + $0x8] sm:$0xff]
        %v1194 = vld [vmem:[%s290 + $0x10] sm:$0xff]
        %v1195 = vld [vmem:[%s290 + $0x18] sm:$0xff]
        %v1196 = vld [vmem:[%s290 + $0x20] sm:$0xff]
        %v1197 = vld [vmem:[%s290 + $0x28] sm:$0xff]
        %v1198 = vld [vmem:[%s290 + $0x30] sm:$0xff]
        %v1199 = vld [vmem:[%s290 + $0x38] sm:$0xff]
        %v1200 = vsel %vm899, %v1192, 0.0
        %v1201 = vsel %vm899, %v1193, 0.0
        %v1202 = vadd.f32 %v1200, %v1201
        %v1203 = vsel %vm899, %v1194, 0.0
        %v1204 = vadd.f32 %v1202, %v1203
        %v1205 = vsel %vm899, %v1195, 0.0
        %v1206 = vadd.f32 %v1204, %v1205
        %v1207 = vsel %vm899, %v1196, 0.0
        %v1208 = vadd.f32 %v1206, %v1207
        %v1209 = vsel %vm899, %v1197, 0.0
        %v1210 = vadd.f32 %v1208, %v1209
        %v1211 = vsel %vm899, %v1198, 0.0
        %v1212 = vadd.f32 %v1210, %v1211
        %v1213 = vsel %vm899, %v1199, 0.0
        %v1214 = vadd.f32 %v1212, %v1213
        %v1215 = vrot.slane %v1214, 4
        %v1216 = vadd.f32 %v1214, %v1215
        %v1217 = vrot.slane %v1216, 2
        %v1218 = vadd.f32 %v1216, %v1217
        %v1219 = vrot.slane %v1218, 1
        %v1220 = vadd.f32 %v1218, %v1219
        %vm1221 = vcmask 253952
        %1222 = vst.msk [vmem:[%s297] sm:$0x1] %vm1221, %v1220
        %v1223 = vmul.f32 %v1192, %v1192
        %v1224 = vmul.f32 %v1193, %v1193
        %v1225 = vmul.f32 %v1194, %v1194
        %v1226 = vmul.f32 %v1195, %v1195
        %v1227 = vmul.f32 %v1196, %v1196
        %v1228 = vmul.f32 %v1197, %v1197
        %v1229 = vmul.f32 %v1198, %v1198
        %v1230 = vmul.f32 %v1199, %v1199
        %v1231 = vsel %vm899, %v1223, 0.0
        %v1232 = vsel %vm899, %v1224, 0.0
        %v1233 = vadd.f32 %v1231, %v1232
        %v1234 = vsel %vm899, %v1225, 0.0
        %v1235 = vadd.f32 %v1233, %v1234
        %v1236 = vsel %vm899, %v1226, 0.0
        %v1237 = vadd.f32 %v1235, %v1236
        %v1238 = vsel %vm899, %v1227, 0.0
        %v1239 = vadd.f32 %v1237, %v1238
        %v1240 = vsel %vm899, %v1228, 0.0
        %v1241 = vadd.f32 %v1239, %v1240
        %v1242 = vsel %vm899, %v1229, 0.0
        %v1243 = vadd.f32 %v1241, %v1242
        %v1244 = vsel %vm899, %v1230, 0.0
        %v1245 = vadd.f32 %v1243, %v1244
        %v1246 = vrot.slane %v1245, 4
        %v1247 = vadd.f32 %v1245, %v1246
        %v1248 = vrot.slane %v1247, 2
        %v1249 = vadd.f32 %v1247, %v1248
        %v1250 = vrot.slane %v1249, 1
        %v1251 = vadd.f32 %v1249, %v1250
        %1252 = vst.msk [vmem:[%s304] sm:$0x1] %vm1221, %v1251
      $region36: #{cnn_3d_forward.6} parent=27 // pred_fallthru
        _
      %p1253 = scmp.lt.s32.totalorder %s21, 1
      %s1254 = scalar_select %p1253, %s21, 1
      %p1255 = scmp.lt.s32.totalorder %s22, 7
      %s1256 = scalar_select %p1255, %s22, 7
      %s1257 = smul.addr %s1256, 8
      %s1258 = smul.addr %s1254, 64
      %s1259 = sadd.s32 %s1257, %s1258
      %s1260 = smul.addr %s1259, 8
      %s1261 = scalar_lea.vmem %s2, %s1260
      %p1262 = scmp.lt.s32.totalorder %s21, 1
      %s1263 = scalar_select %p1262, %s21, 1
      %p1264 = scmp.lt.s32.totalorder %s22, 7
      %s1265 = scalar_select %p1264, %s22, 7
      %s1266 = smul.addr %s1263, 8
      %s1267 = sadd.s32 %s1265, %s1266
      %s1268 = scalar_lea.vmem %s3, %s1267
      %p1269 = scmp.lt.s32.totalorder %s21, 1
      %s1270 = scalar_select %p1269, %s21, 1
      %p1271 = scmp.lt.s32.totalorder %s22, 7
      %s1272 = scalar_select %p1271, %s22, 7
      %s1273 = smul.addr %s1270, 8
      %s1274 = sadd.s32 %s1272, %s1273
      %s1275 = scalar_lea.vmem %s4, %s1274
      // Predicated region
      $region37: #{cnn_3d_forward.6} parent=27 // pred_check
        %p1276 = pneg %p111
      $region38: #{cnn_3d_forward.6} parent=27 // pred_check_branch
        %1278 = sbr.rel (%p1276) target = $region40
      $region39: #{cnn_3d_forward.6} parent=27 // pred_region
        _
      $region40: #{cnn_3d_forward.6} parent=27 // pred_fallthru
        _
      // Predicated region
      $region41: #{cnn_3d_forward.6} parent=27 // pred_check
        %p1279 = pneg %p139
      $region42: #{cnn_3d_forward.6} parent=27 // pred_check_branch
        %1281 = sbr.rel (%p1279) target = $region44
      $region43: #{cnn_3d_forward.6} parent=27 // pred_region
        _
      $region44: #{cnn_3d_forward.6} parent=27 // pred_fallthru
        _
      // Predicated region
      $region45: #{cnn_3d_forward.6} parent=27 // pred_check
        %p1282 = pneg %p167
      $region46: #{cnn_3d_forward.6} parent=27 // pred_check_branch
        %1284 = sbr.rel (%p1282) target = $region48
      $region47: #{cnn_3d_forward.6} parent=27 // pred_region
        _
      $region48: #{cnn_3d_forward.6} parent=27 // pred_fallthru
        _
    $region28: #{cnn_3d_forward.6} parent=5 // pred_fallthru
      _
    %p1285 = scmp.le.s32.totalorder 2, %s11
    // Predicated region
    $region49: #{cnn_3d_forward.6} parent=5 // pred_check
      %p1286 = pneg %p1285
    $region50: #{cnn_3d_forward.6} parent=5 // pred_check_branch
      %1288 = sbr.rel (%p1286) target = $region52
    $region51: #{cnn_3d_forward.6} parent=5 // pred_region
      %s1289 = ssub.s32 %s11, 2
      // Predicated region
      $region53: #{cnn_3d_forward.6} parent=51 // pred_check
        %p1290 = pneg %p117
      $region54: #{cnn_3d_forward.6} parent=51 // pred_check_branch
        %1292 = sbr.rel (%p1290) target = $region56
      $region55: #{cnn_3d_forward.6} parent=51 // pred_region
        %p1293 = scmp.lt.s32.totalorder %s24, 1
        %s1294 = scalar_select %p1293, %s24, 1
        %p1295 = scmp.lt.s32.totalorder %s25, 7
        %s1296 = scalar_select %p1295, %s25, 7
        %s1297 = smul.addr %s1296, 8
        %s1298 = smul.addr %s1294, 64
        %s1299 = sadd.s32 %s1297, %s1298
        %s1300 = smul.addr %s1299, 8
        %s1301 = scalar_lea.vmem %s2, %s1300
      $region56: #{cnn_3d_forward.6} parent=51 // pred_fallthru
        _
      // Predicated region
      $region57: #{cnn_3d_forward.6} parent=51 // pred_check
        %p1302 = pneg %p145
      $region58: #{cnn_3d_forward.6} parent=51 // pred_check_branch
        %1304 = sbr.rel (%p1302) target = $region60
      $region59: #{cnn_3d_forward.6} parent=51 // pred_region
        %p1305 = scmp.lt.s32.totalorder %s24, 1
        %s1306 = scalar_select %p1305, %s24, 1
        %p1307 = scmp.lt.s32.totalorder %s25, 7
        %s1308 = scalar_select %p1307, %s25, 7
        %s1309 = smul.addr %s1306, 8
        %s1310 = sadd.s32 %s1308, %s1309
        %s1311 = scalar_lea.vmem %s3, %s1310
      $region60: #{cnn_3d_forward.6} parent=51 // pred_fallthru
        _
      // Predicated region
      $region61: #{cnn_3d_forward.6} parent=51 // pred_check
        %p1312 = pneg %p173
      $region62: #{cnn_3d_forward.6} parent=51 // pred_check_branch
        %1314 = sbr.rel (%p1312) target = $region64
      $region63: #{cnn_3d_forward.6} parent=51 // pred_region
        %p1315 = scmp.lt.s32.totalorder %s24, 1
        %s1316 = scalar_select %p1315, %s24, 1
        %p1317 = scmp.lt.s32.totalorder %s25, 7
        %s1318 = scalar_select %p1317, %s25, 7
        %s1319 = smul.addr %s1316, 8
        %s1320 = sadd.s32 %s1318, %s1319
        %s1321 = scalar_lea.vmem %s4, %s1320
      $region64: #{cnn_3d_forward.6} parent=51 // pred_fallthru
        _
    $region52: #{cnn_3d_forward.6} parent=5 // pred_fallthru
      _
  $region6: #{cnn_3d_forward.6} parent=0 // loop_footer
    %s15 = sadd.s32 1, %s11
  $region7: #{cnn_3d_forward.6} parent=0 // loop_footer_branch
    %10 = sbr.rel target = $region3
  $region8: #{cnn_3d_forward.6} parent=0 // loop_exit
    _

</llo_original>
